<compile_context>
chip_gen: v7x
topology: tpu7x:2x2x1
jax: 0.10.0
libtpu: 0.0.40
codegen_flags: <defaults>
</compile_context>

<pallas_src>
import jax
import jax.numpy as jnp
from jax.experimental import pallas as pl
from jax.experimental.pallas import tpu as pltpu

D_IN = 28 * 28        # 784
H = 400               # logical hidden size
H_PAD = 512           # lane-padded hidden size (multiple of 128)
D_OUT = 10
OUT_PAD = 128         # lane-padded output size
BN_EPS = 1e-5


# ----------------------------------------------------------------------------------
# Kernels
# ----------------------------------------------------------------------------------
def _make_single_kernel(b_true):
    """Whole (row-padded) batch resident in VMEM; exact batch-BN over the b_true rows."""

    def kernel(x_ref, w1_ref, g1_ref, be1_ref,
               w2_ref, g2_ref, be2_ref,
               w3_ref, b3_ref, o_ref):
        b_pad = x_ref.shape[0]
        inv_b = 1.0 / b_true

        def bn_relu(h, g, be, mask_rows):
            if mask_rows:
                valid = jax.lax.broadcasted_iota(jnp.int32, (b_pad, 1), 0) < b_true
                hm = jnp.where(valid, h, 0.0)
            else:
                hm = h
            mu = jnp.sum(hm, axis=0, keepdims=True) * inv_b
            ss = jnp.sum(hm * hm, axis=0, keepdims=True) * inv_b
            var = jnp.maximum(ss - mu * mu, 0.0)          # biased batch variance
            scale = g * jax.lax.rsqrt(var + BN_EPS)
            shift = be - mu * scale
            return jnp.maximum(h * scale + shift, 0.0)

        # layer 1 (bias dropped: cancelled by BN).  Padded rows stay exactly zero.
        h = jnp.dot(x_ref[...], w1_ref[...], preferred_element_type=jnp.float32)
        h = bn_relu(h, g1_ref[...], be1_ref[...], mask_rows=False)
        # layer 2 (bias dropped).  Padded rows are nonzero after layer-1 ReLU(shift),
        # so mask them out of the statistics.
        h = jnp.dot(h.astype(jnp.bfloat16), w2_ref[...],
                    preferred_element_type=jnp.float32)
        h = bn_relu(h, g2_ref[...], be2_ref[...], mask_rows=(b_pad != b_true))
        # output layer
        out = jnp.dot(h.astype(jnp.bfloat16), w3_ref[...],
                      preferred_element_type=jnp.float32) + b3_ref[...]
        o_ref[...] = out.astype(o_ref.dtype)

    return kernel


def _layer1_kernel(x_ref, w1_ref, h1_ref, st_ref):
    """Tiled pass 1: h1p = x @ w1 (no bias), cache bf16, emit per-tile sum / sumsq."""
    h1p = jnp.dot(x_ref[...], w1_ref[...], preferred_element_type=jnp.float32)
    h1_ref[...] = h1p.astype(jnp.bfloat16)
    # Zero-padded batch rows contribute exactly 0 (zero input rows, no bias).
    s = jnp.sum(h1p, axis=0, keepdims=True)
    ss = jnp.sum(h1p * h1p, axis=0, keepdims=True)
    st_ref[...] = jnp.concatenate(
        [s, ss, jnp.zeros((6, H_PAD), jnp.float32)], axis=0)[None]


def _make_layer2_kernel(b_true, tile_b):
    """Tiled pass 2: BN1+ReLU on cached h1p, h2p = h1 @ w2, cache bf16, emit stats."""

    def kernel(sc1_ref, sh1_ref, h1_ref, w2_ref, h2_ref, st_ref):
        h1 = jnp.maximum(
            h1_ref[...].astype(jnp.float32) * sc1_ref[...] + sh1_ref[...], 0.0)
        h2p = jnp.dot(h1.astype(jnp.bfloat16), w2_ref[...],
                      preferred_element_type=jnp.float32)
        h2_ref[...] = h2p.astype(jnp.bfloat16)
        # Mask padded batch rows out of the statistics.
        row = (pl.program_id(0) * tile_b
               + jax.lax.broadcasted_iota(jnp.int32, (tile_b, 1), 0))
        hm = jnp.where(row < b_true, h2p, 0.0)
        s = jnp.sum(hm, axis=0, keepdims=True)
        ss = jnp.sum(hm * hm, axis=0, keepdims=True)
        st_ref[...] = jnp.concatenate(
            [s, ss, jnp.zeros((6, H_PAD), jnp.float32)], axis=0)[None]

    return kernel


def _out_kernel(sc2_ref, sh2_ref, h2_ref, w3_ref, b3_ref, o_ref):
    """Tiled pass 3: BN2+ReLU on cached h2p, logits = h2 @ w3 + b3 (bf16 writeback)."""
    h2 = jnp.maximum(
        h2_ref[...].astype(jnp.float32) * sc2_ref[...] + sh2_ref[...], 0.0)
    out = jnp.dot(h2.astype(jnp.bfloat16), w3_ref[...],
                  preferred_element_type=jnp.float32) + b3_ref[...]
    o_ref[...] = out.astype(o_ref.dtype)


# ----------------------------------------------------------------------------------
# Parameter prep (do ONCE): lane-pad, cast weights bf16; BN vectors + b3 stay f32.
# b1/b2 are intentionally not emitted (cancelled by BatchNorm mean subtraction).
# ----------------------------------------------------------------------------------
def prepare_params(params):
    (w1, b1, g1, be1, w2, b2, g2, be2, w3, b3) = params
    del b1, b2   # exactly cancelled by training-mode BatchNorm

    def pw(w, r, c):
        w = jnp.asarray(w, jnp.float32)
        return jnp.pad(w, ((0, r - w.shape[0]), (0, c - w.shape[1]))).astype(jnp.bfloat16)

    def pv(v, n):
        v = jnp.asarray(v, jnp.float32)
        return jnp.pad(v, (0, n - v.shape[0])).reshape(1, n)

    return {
        "w1": pw(w1, D_IN, H_PAD),   "g1": pv(g1, H_PAD), "be1": pv(be1, H_PAD),
        "w2": pw(w2, H_PAD, H_PAD),  "g2": pv(g2, H_PAD), "be2": pv(be2, H_PAD),
        "w3": pw(w3, H_PAD, OUT_PAD), "b3": pv(b3, OUT_PAD),
    }


# ----------------------------------------------------------------------------------
# VMEM sizing (generation-aware: 64 MiB/TC on v7x, 128 MiB on v5e/v6e)
# ----------------------------------------------------------------------------------
_W_BYTES = (2 * (D_IN * H_PAD + H_PAD * H_PAD + H_PAD * OUT_PAD)
            + 4 * (4 * H_PAD + OUT_PAD))


def _vmem_capacity():
    try:
        return int(pltpu.get_tpu_info().vmem_capacity_bytes)
    except Exception:
        return 64 << 20   # conservative (v7x per-TensorCore)


def _vmem_limit(est, cap):
    # ~1.4x safety factor (not 2x), capped a little under physical VMEM.
    return int(min(max(int(est * 1.4) + (2 << 20), 16 << 20), cap - (2 << 20)))


def _vmem_single(b8):
    # bf16 x + bf16 out + ~5 live (b8, H_PAD) f32 temporaries + weights.
    return _W_BYTES + b8 * (2 * D_IN + 2 * OUT_PAD) + 5 * b8 * H_PAD * 4


def _vmem_tiled_a(tb):   # layer-1 call
    return (2 * tb * D_IN * 2 + 2 * D_IN * H_PAD * 2 + 2 * tb * H_PAD * 2
            + 2 * 8 * H_PAD * 4 + 3 * tb * H_PAD * 4)


def _vmem_tiled_b(tb):   # layer-2 call (largest)
    return (4 * tb * H_PAD * 2 + 2 * H_PAD * H_PAD * 2
            + 2 * 8 * H_PAD * 4 + 4 * tb * H_PAD * 4 + 8 * H_PAD * 4)


def _vmem_tiled_c(tb):   # output call
    return (2 * tb * H_PAD * 2 + 2 * H_PAD * OUT_PAD * 2 + 2 * tb * OUT_PAD * 2
            + 2 * tb * H_PAD * 4 + tb * OUT_PAD * 4)


def _pick_tile(requested, cap):
    tb = max(8, (int(requested) // 8) * 8)
    while tb > 256 and int(1.4 * max(_vmem_tiled_a(tb), _vmem_tiled_b(tb),
                                     _vmem_tiled_c(tb))) > cap - (8 << 20):
        tb //= 2
    return tb


# ----------------------------------------------------------------------------------
# Forward wrapper
# ----------------------------------------------------------------------------------
def _finish_stats(partials, b_true, g, be):
    """Reduce per-tile partial (sum, sumsq) -> BN scale/shift vectors (tiny XLA op)."""
    s = jnp.sum(partials[:, 0, :], axis=0)
    ss = jnp.sum(partials[:, 1, :], axis=0)
    mu = s / b_true
    var = jnp.maximum(ss / b_true - mu * mu, 0.0)
    scale = g[0] * jax.lax.rsqrt(var + BN_EPS)
    shift = be[0] - mu * scale
    return scale.reshape(1, H_PAD), shift.reshape(1, H_PAD)


def mlp_forward(x, params, *, batch_tile=1024, force_tiled=False):
    """x: (B, 1, 28, 28) or (B, 784).  Returns (B, 10) float32 logits (training-mode BN)."""
    pp = params if isinstance(params, dict) else prepare_params(params)
    b = x.shape[0]
    x2 = x.reshape(b, -1)
    assert x2.shape[1] == D_IN
    x2 = x2.astype(jnp.bfloat16)

    cap = _vmem_capacity()
    single_budget = min(max(cap // 2, 24 << 20), 80 << 20)
    b8 = ((b + 7) // 8) * 8

    if not force_tiled and _vmem_single(b8) <= single_budget:
        # ---- small batch: single VMEM-resident block ----
        xs = jnp.pad(x2, ((0, b8 - b), (0, 0))) if b8 != b else x2
        vmem = pl.BlockSpec(memory_space=pltpu.MemorySpace.VMEM)
        out = pl.pallas_call(
            _make_single_kernel(b),
            out_shape=jax.ShapeDtypeStruct((b8, OUT_PAD), jnp.bfloat16),
            in_specs=[vmem] * 9,
            out_specs=vmem,
            compiler_params=pltpu.CompilerParams(
                vmem_limit_bytes=_vmem_limit(_vmem_single(b8), cap)),
        )(xs, pp["w1"], pp["g1"], pp["be1"],
          pp["w2"], pp["g2"], pp["be2"], pp["w3"], pp["b3"])
        return out[:b, :D_OUT].astype(jnp.float32)

    # ---- large batch: 3 parallel-over-tiles pallas_calls with activation caching ----
    tile_b = _pick_tile(batch_tile, cap)
    b_pad = -(-b // tile_b) * tile_b
    if b_pad != b:
        x2 = jnp.pad(x2, ((0, b_pad - b), (0, 0)))       # zero rows (masked in stats)
    nt = b_pad // tile_b

    pinned = lambda shape: pl.BlockSpec(shape, lambda t: tuple(0 for _ in shape))
    row2 = lambda last: pl.BlockSpec((tile_b, last), lambda t: (t, 0))
    stat_spec = pl.BlockSpec((1, 8, H_PAD), lambda t: (t, 0, 0))
    parallel = lambda est: pltpu.CompilerParams(
        dimension_semantics=("parallel",),
        vmem_limit_bytes=_vmem_limit(est, cap))

    # pass 1: layer-1 matmul, cache h1p, partial BN-1 stats
    h1c, st1 = pl.pallas_call(
        _layer1_kernel,
        out_shape=(jax.ShapeDtypeStruct((b_pad, H_PAD), jnp.bfloat16),
                   jax.ShapeDtypeStruct((nt, 8, H_PAD), jnp.float32)),
        grid_spec=pltpu.PrefetchScalarGridSpec(
            num_scalar_prefetch=0, grid=(nt,),
            in_specs=[row2(D_IN), pinned((D_IN, H_PAD))],
            out_specs=[row2(H_PAD), stat_spec]),
        compiler_params=parallel(_vmem_tiled_a(tile_b)),
    )(x2, pp["w1"])
    sc1, sh1 = _finish_stats(st1, b, pp["g1"], pp["be1"])

    # pass 2: BN1+ReLU, layer-2 matmul, cache h2p, partial BN-2 stats
    h2c, st2 = pl.pallas_call(
        _make_layer2_kernel(b, tile_b),
        out_shape=(jax.ShapeDtypeStruct((b_pad, H_PAD), jnp.bfloat16),
                   jax.ShapeDtypeStruct((nt, 8, H_PAD), jnp.float32)),
        grid_spec=pltpu.PrefetchScalarGridSpec(
            num_scalar_prefetch=0, grid=(nt,),
            in_specs=[pinned((1, H_PAD)), pinned((1, H_PAD)),
                      row2(H_PAD), pinned((H_PAD, H_PAD))],
            out_specs=[row2(H_PAD), stat_spec]),
        compiler_params=parallel(_vmem_tiled_b(tile_b)),
    )(sc1, sh1, h1c, pp["w2"])
    sc2, sh2 = _finish_stats(st2, b, pp["g2"], pp["be2"])

    # pass 3: BN2+ReLU, output matmul (bf16 logits)
    out = pl.pallas_call(
        _out_kernel,
        out_shape=jax.ShapeDtypeStruct((b_pad, OUT_PAD), jnp.bfloat16),
        grid_spec=pltpu.PrefetchScalarGridSpec(
            num_scalar_prefetch=0, grid=(nt,),
            in_specs=[pinned((1, H_PAD)), pinned((1, H_PAD)),
                      row2(H_PAD), pinned((H_PAD, OUT_PAD)), pinned((1, OUT_PAD))],
            out_specs=row2(OUT_PAD)),
        compiler_params=parallel(_vmem_tiled_c(tile_b)),
    )(sc2, sh2, h2c, pp["w3"], pp["b3"])

    return out[:b, :D_OUT].astype(jnp.float32)


# ----------------------------------------------------------------------------------
# Init + pure-JAX f32 reference (matches the PyTorch module in training mode)
# ----------------------------------------------------------------------------------
def init_params(key):
    """PyTorch-default init: U(-1/sqrt(fan_in), 1/sqrt(fan_in)); BN gamma=1, beta=0."""
    ks = jax.random.split(key, 6)

    def linear(kw, kb, fan_in, fan_out):
        bound = 1.0 / jnp.sqrt(jnp.float32(fan_in))
        w = jax.random.uniform(kw, (fan_in, fan_out), jnp.float32, -bound, bound)
        b = jax.random.uniform(kb, (fan_out,), jnp.float32, -bound, bound)
        return w, b

    w1, b1 = linear(ks[0], ks[1], D_IN, H)
    w2, b2 = linear(ks[2], ks[3], H, H)
    w3, b3 = linear(ks[4], ks[5], H, D_OUT)
    g1, be1 = jnp.ones((H,), jnp.float32), jnp.zeros((H,), jnp.float32)
    g2, be2 = jnp.ones((H,), jnp.float32), jnp.zeros((H,), jnp.float32)
    return (w1, b1, g1, be1, w2, b2, g2, be2, w3, b3)


def _reference(x, params):
    (w1, b1, g1, be1, w2, b2, g2, be2, w3, b3) = params
    h = x.reshape(x.shape[0], -1).astype(jnp.float32)

    def block(h, w, b, g, be):
        h = h @ w + b
        mu = jnp.mean(h, axis=0, keepdims=True)
        var = jnp.mean((h - mu) ** 2, axis=0, keepdims=True)   # biased batch variance
        h = (h - mu) / jnp.sqrt(var + BN_EPS) * g + be
        return jnp.maximum(h, 0.0)

    h = block(h, w1, b1, g1, be1)
    h = block(h, w2, b2, g2, be2)
    return h @ w3 + b3


if __name__ == "__main__":
    key = jax.random.PRNGKey(0)
    kx, kp, kx2 = jax.random.split(key, 3)

    params = init_params(kp)
    pp = prepare_params(params)          # bf16 / lane-padded params, prepared once

    # Small batch -> single VMEM-resident kernel.
    x_small = jax.random.normal(kx, (8, 1, 28, 28), dtype=jnp.float32)
    out_small = jax.block_until_ready(mlp_forward(x_small, pp))
    ref_small = _reference(x_small, params)
    assert out_small.shape == (8, D_OUT)
    assert jnp.allclose(out_small, ref_small, atol=1e-1, rtol=5e-2), \
        float(jnp.max(jnp.abs(out_small - ref_small)))

    # Ragged batch -> exercise the tiled 3-call path (exact full-batch BN stats,
    # activation caching, padded rows masked out of the statistics).
    x_big = jax.random.normal(kx2, (13, 1, 28, 28), dtype=jnp.float32)
    out_big = jax.block_until_ready(
        mlp_forward(x_big, pp, batch_tile=8, force_tiled=True))
    ref_big = _reference(x_big, params)
    assert out_big.shape == (13, D_OUT)
    assert jnp.allclose(out_big, ref_big, atol=1e-1, rtol=5e-2), \
        float(jnp.max(jnp.abs(out_big - ref_big)))

    print("KERNEL_OK")
</pallas_src>

<mosaic_0001>
module attributes {stable_mosaic.version = 11 : i64} {
  func.func @kernel(%arg0: memref<8x784xbf16, #tpu.memory_space<vmem>>, %arg1: memref<784x512xbf16, #tpu.memory_space<vmem>>, %arg2: memref<1x512xf32, #tpu.memory_space<vmem>>, %arg3: memref<1x512xf32, #tpu.memory_space<vmem>>, %arg4: memref<512x512xbf16, #tpu.memory_space<vmem>>, %arg5: memref<1x512xf32, #tpu.memory_space<vmem>>, %arg6: memref<1x512xf32, #tpu.memory_space<vmem>>, %arg7: memref<512x128xbf16, #tpu.memory_space<vmem>>, %arg8: memref<1x128xf32, #tpu.memory_space<vmem>>, %arg9: memref<8x128xbf16, #tpu.memory_space<vmem>>) attributes {dimension_semantics = [], scalar_prefetch = 0 : i64, scratch_operands = 0 : i64, tpu.core_type = #tpu.core_type<tc>} {
    %c0 = arith.constant 0 : index
    %c0_0 = arith.constant 0 : index
    %0 = vector.load %arg0[%c0, %c0_0] : memref<8x784xbf16, #tpu.memory_space<vmem>>, vector<8x784xbf16>
    %c0_1 = arith.constant 0 : index
    %c0_2 = arith.constant 0 : index
    %1 = vector.load %arg1[%c0_1, %c0_2] : memref<784x512xbf16, #tpu.memory_space<vmem>>, vector<784x512xbf16>
    %cst = arith.constant dense<0.000000e+00> : vector<8x512xf32>
    %2 = tpu.matmul %0, %1, %cst {dimension_numbers = #tpu.dot_dimension_numbers<[1], [0], [0], [1], [0, 0, 1, 1], [], []>} : vector<8x784xbf16>, vector<784x512xbf16>, vector<8x512xf32> -> vector<8x512xf32>
    %c0_3 = arith.constant 0 : index
    %c0_4 = arith.constant 0 : index
    %3 = vector.load %arg2[%c0_3, %c0_4] : memref<1x512xf32, #tpu.memory_space<vmem>>, vector<1x512xf32>
    %c0_5 = arith.constant 0 : index
    %c0_6 = arith.constant 0 : index
    %4 = vector.load %arg3[%c0_5, %c0_6] : memref<1x512xf32, #tpu.memory_space<vmem>>, vector<1x512xf32>
    %cst_7 = arith.constant dense<0.000000e+00> : vector<512xf32>
    %5 = vector.multi_reduction <add>, %2, %cst_7 [0] : vector<8x512xf32> to vector<512xf32>
    %6 = vector.shape_cast %5 : vector<512xf32> to vector<1x512xf32>
    %cst_8 = arith.constant 1.250000e-01 : f32
    %7 = vector.broadcast %cst_8 : f32 to vector<1x512xf32>
    %8 = arith.mulf %6, %7 : vector<1x512xf32>
    %9 = arith.mulf %2, %2 : vector<8x512xf32>
    %cst_9 = arith.constant dense<0.000000e+00> : vector<512xf32>
    %10 = vector.multi_reduction <add>, %9, %cst_9 [0] : vector<8x512xf32> to vector<512xf32>
    %11 = vector.shape_cast %10 : vector<512xf32> to vector<1x512xf32>
    %cst_10 = arith.constant 1.250000e-01 : f32
    %12 = vector.broadcast %cst_10 : f32 to vector<1x512xf32>
    %13 = arith.mulf %11, %12 : vector<1x512xf32>
    %14 = arith.mulf %8, %8 : vector<1x512xf32>
    %15 = arith.subf %13, %14 : vector<1x512xf32>
    %cst_11 = arith.constant 0.000000e+00 : f32
    %16 = vector.broadcast %cst_11 : f32 to vector<1x512xf32>
    %17 = arith.maximumf %15, %16 : vector<1x512xf32>
    %cst_12 = arith.constant 9.99999974E-6 : f32
    %18 = vector.broadcast %cst_12 : f32 to vector<1x512xf32>
    %19 = arith.addf %17, %18 : vector<1x512xf32>
    %20 = math.rsqrt %19 : vector<1x512xf32>
    %21 = arith.mulf %3, %20 : vector<1x512xf32>
    %22 = arith.mulf %8, %21 : vector<1x512xf32>
    %23 = arith.subf %4, %22 : vector<1x512xf32>
    %24 = vector.broadcast %21 : vector<1x512xf32> to vector<8x512xf32>
    %25 = arith.mulf %2, %24 : vector<8x512xf32>
    %26 = vector.broadcast %23 : vector<1x512xf32> to vector<8x512xf32>
    %27 = arith.addf %25, %26 : vector<8x512xf32>
    %cst_13 = arith.constant 0.000000e+00 : f32
    %28 = vector.broadcast %cst_13 : f32 to vector<8x512xf32>
    %29 = arith.maximumf %27, %28 : vector<8x512xf32>
    %30 = arith.truncf %29 : vector<8x512xf32> to vector<8x512xbf16>
    %c0_14 = arith.constant 0 : index
    %c0_15 = arith.constant 0 : index
    %31 = vector.load %arg4[%c0_14, %c0_15] : memref<512x512xbf16, #tpu.memory_space<vmem>>, vector<512x512xbf16>
    %cst_16 = arith.constant dense<0.000000e+00> : vector<8x512xf32>
    %32 = tpu.matmul %30, %31, %cst_16 {dimension_numbers = #tpu.dot_dimension_numbers<[1], [0], [0], [1], [0, 0, 1, 1], [], []>} : vector<8x512xbf16>, vector<512x512xbf16>, vector<8x512xf32> -> vector<8x512xf32>
    %c0_17 = arith.constant 0 : index
    %c0_18 = arith.constant 0 : index
    %33 = vector.load %arg5[%c0_17, %c0_18] : memref<1x512xf32, #tpu.memory_space<vmem>>, vector<1x512xf32>
    %c0_19 = arith.constant 0 : index
    %c0_20 = arith.constant 0 : index
    %34 = vector.load %arg6[%c0_19, %c0_20] : memref<1x512xf32, #tpu.memory_space<vmem>>, vector<1x512xf32>
    %cst_21 = arith.constant dense<0.000000e+00> : vector<512xf32>
    %35 = vector.multi_reduction <add>, %32, %cst_21 [0] : vector<8x512xf32> to vector<512xf32>
    %36 = vector.shape_cast %35 : vector<512xf32> to vector<1x512xf32>
    %cst_22 = arith.constant 1.250000e-01 : f32
    %37 = vector.broadcast %cst_22 : f32 to vector<1x512xf32>
    %38 = arith.mulf %36, %37 : vector<1x512xf32>
    %39 = arith.mulf %32, %32 : vector<8x512xf32>
    %cst_23 = arith.constant dense<0.000000e+00> : vector<512xf32>
    %40 = vector.multi_reduction <add>, %39, %cst_23 [0] : vector<8x512xf32> to vector<512xf32>
    %41 = vector.shape_cast %40 : vector<512xf32> to vector<1x512xf32>
    %cst_24 = arith.constant 1.250000e-01 : f32
    %42 = vector.broadcast %cst_24 : f32 to vector<1x512xf32>
    %43 = arith.mulf %41, %42 : vector<1x512xf32>
    %44 = arith.mulf %38, %38 : vector<1x512xf32>
    %45 = arith.subf %43, %44 : vector<1x512xf32>
    %cst_25 = arith.constant 0.000000e+00 : f32
    %46 = vector.broadcast %cst_25 : f32 to vector<1x512xf32>
    %47 = arith.maximumf %45, %46 : vector<1x512xf32>
    %cst_26 = arith.constant 9.99999974E-6 : f32
    %48 = vector.broadcast %cst_26 : f32 to vector<1x512xf32>
    %49 = arith.addf %47, %48 : vector<1x512xf32>
    %50 = math.rsqrt %49 : vector<1x512xf32>
    %51 = arith.mulf %33, %50 : vector<1x512xf32>
    %52 = arith.mulf %38, %51 : vector<1x512xf32>
    %53 = arith.subf %34, %52 : vector<1x512xf32>
    %54 = vector.broadcast %51 : vector<1x512xf32> to vector<8x512xf32>
    %55 = arith.mulf %32, %54 : vector<8x512xf32>
    %56 = vector.broadcast %53 : vector<1x512xf32> to vector<8x512xf32>
    %57 = arith.addf %55, %56 : vector<8x512xf32>
    %cst_27 = arith.constant 0.000000e+00 : f32
    %58 = vector.broadcast %cst_27 : f32 to vector<8x512xf32>
    %59 = arith.maximumf %57, %58 : vector<8x512xf32>
    %60 = arith.truncf %59 : vector<8x512xf32> to vector<8x512xbf16>
    %c0_28 = arith.constant 0 : index
    %c0_29 = arith.constant 0 : index
    %61 = vector.load %arg7[%c0_28, %c0_29] : memref<512x128xbf16, #tpu.memory_space<vmem>>, vector<512x128xbf16>
    %cst_30 = arith.constant dense<0.000000e+00> : vector<8x128xf32>
    %62 = tpu.matmul %60, %61, %cst_30 {dimension_numbers = #tpu.dot_dimension_numbers<[1], [0], [0], [1], [0, 0, 1, 1], [], []>} : vector<8x512xbf16>, vector<512x128xbf16>, vector<8x128xf32> -> vector<8x128xf32>
    %c0_31 = arith.constant 0 : index
    %c0_32 = arith.constant 0 : index
    %63 = vector.load %arg8[%c0_31, %c0_32] : memref<1x128xf32, #tpu.memory_space<vmem>>, vector<1x128xf32>
    %64 = vector.broadcast %63 : vector<1x128xf32> to vector<8x128xf32>
    %65 = arith.addf %62, %64 : vector<8x128xf32>
    %66 = arith.truncf %65 : vector<8x128xf32> to vector<8x128xbf16>
    %c0_33 = arith.constant 0 : index
    %c0_34 = arith.constant 0 : index
    %67 = vector.load %arg9[%c0_33, %c0_34] : memref<8x128xbf16, #tpu.memory_space<vmem>>, vector<8x128xbf16>
    tpu.vector_store %arg9[%c0_33, %c0_34], %66 {strides = array<i32>} : memref<8x128xbf16, #tpu.memory_space<vmem>>, vector<8x128xbf16>,
    return
  }
}

</mosaic_0001>

<llo_original>
// kernel: tpu_custom_call.1
$region0: #{tpu_custom_call.1}
  #allocation0 [shape = 'u32[]', space=smem, size = 0x4, offset = 0x4, fixed_abs, tag = 'smem constant byte address 0x4 - core index']
  #allocation1 [shape = 'u32[144,128]{1,0:T(1,128)}', space=vmem, size = 0x12000, scoped, tag = 'internal scratch']
  %s0 = inlined_call_operand.hbm [shape: bf16[8,784], index: 0, kind: input, shape index: {}]
  %s1 = inlined_call_operand.hbm [shape: bf16[784,512], index: 1, kind: input, shape index: {}]
  %s2 = inlined_call_operand.vmem [shape: f32[1,512], index: 2, kind: input, shape index: {}]
  %s3 = inlined_call_operand.vmem [shape: f32[1,512], index: 3, kind: input, shape index: {}]
  %s4 = inlined_call_operand.hbm [shape: bf16[512,512], index: 4, kind: input, shape index: {}]
  %s5 = inlined_call_operand.vmem [shape: f32[1,512], index: 5, kind: input, shape index: {}]
  %s6 = inlined_call_operand.vmem [shape: f32[1,512], index: 6, kind: input, shape index: {}]
  %s7 = inlined_call_operand.hbm [shape: bf16[512,128], index: 7, kind: input, shape index: {}]
  %s8 = inlined_call_operand.vmem [shape: f32[1,128], index: 8, kind: input, shape index: {}]
  %s9 = inlined_call_operand.hbm [shape: bf16[8,128], index: 9, kind: output, shape index: {}]
  %s10 = sld [smem:[#allocation0]]
  $region62: #{tpu_custom_call.1} parent=0
    _
  %s12 = ssub.s32 1, %s10
  %s13 = scalar_select 0, %s12, %s10
  $region1: #{tpu_custom_call.1} parent=0
    #allocation2 [shape = 'u8[14336]{0}', space=vmem, size = 0x3800, scoped, tag = 'input window, operand 0, single buffered']
    #allocation3 [shape = 's32[1]{0}', space=sflag, size = 0x4, scoped, tag = 'scoped memory for tpu_custom_call.1']
    #allocation4 [shape = 's32[1]{0}', space=sflag, size = 0x4, scoped, tag = 'scoped memory for tpu_custom_call.1']
    #allocation5 [shape = 'u8[802816]{0}', space=vmem, size = 0xc4000, scoped, tag = 'input window, operand 1, single buffered']
    #allocation6 [shape = 's32[1]{0}', space=sflag, size = 0x4, scoped, tag = 'scoped memory for tpu_custom_call.1']
    #allocation7 [shape = 'u8[524288]{0}', space=vmem, size = 0x80000, scoped, tag = 'input window, operand 4, single buffered']
    #allocation8 [shape = 'u8[131072]{0}', space=vmem, size = 0x20000, scoped, tag = 'input window, operand 7, single buffered']
    #allocation9 [shape = 's32[1]{0}', space=sflag, size = 0x4, scoped, tag = 'scoped memory for tpu_custom_call.1']
    #allocation10 [shape = 'u8[2048]{0}', space=vmem, size = 0x800, scoped, tag = 'output window, operand 0, single buffered']
    %14 = vsyncpa [#allocation3], 0
    %15 = vsyncpa [#allocation6], 0
    %16 = vsyncpa [#allocation9], 0
    %17 = vsyncpa [#allocation4], 0
    // Predicated region
    $region2: #{tpu_custom_call.1} parent=1 // pred_check
      _
    $region3: #{tpu_custom_call.1} parent=1 // pred_check_branch
      %19 = sbr.rel (0) target = $region5
    $region4: #{tpu_custom_call.1} parent=1 // pred_region
      %s21 = ssub.s32 448, 448
      %22 = vsyncadd [#allocation3], %s21
      %s24 = sshll.u32 [#allocation2], 4
      %s25 = int_to_ptr.vmem [resolvable:$true] %s24
      %27 = dma.hbm_to_vmem [thread:$0]  %s0, 448, %s25, [#allocation3]
    $region5: #{tpu_custom_call.1} parent=1 // pred_fallthru
      _
    // Predicated region
    $region6: #{tpu_custom_call.1} parent=1 // pred_check
      _
    $region7: #{tpu_custom_call.1} parent=1 // pred_check_branch
      %29 = sbr.rel (0) target = $region9
    $region8: #{tpu_custom_call.1} parent=1 // pred_region
      %s31 = ssub.s32 25088, 25088
      %32 = vsyncadd [#allocation6], %s31
      %s33 = sshll.u32 [#allocation5], 4
      %s34 = int_to_ptr.vmem [resolvable:$true] %s33
      %39 = dma.hbm_to_vmem [thread:$0]  %s1, 25088, %s34, [#allocation6], 256, 256, 16
    $region9: #{tpu_custom_call.1} parent=1 // pred_fallthru
      _
    // Predicated region
    $region10: #{tpu_custom_call.1} parent=1 // pred_check
      _
    $region11: #{tpu_custom_call.1} parent=1 // pred_check_branch
      %41 = sbr.rel (0) target = $region13
    $region12: #{tpu_custom_call.1} parent=1 // pred_region
      _
    $region13: #{tpu_custom_call.1} parent=1 // pred_fallthru
      _
    // Predicated region
    $region14: #{tpu_custom_call.1} parent=1 // pred_check
      _
    $region15: #{tpu_custom_call.1} parent=1 // pred_check_branch
      %43 = sbr.rel (0) target = $region17
    $region16: #{tpu_custom_call.1} parent=1 // pred_region
      _
    $region17: #{tpu_custom_call.1} parent=1 // pred_fallthru
      _
    // Predicated region
    $region18: #{tpu_custom_call.1} parent=1 // pred_check
      _
    $region19: #{tpu_custom_call.1} parent=1 // pred_check_branch
      %45 = sbr.rel (0) target = $region21
    $region20: #{tpu_custom_call.1} parent=1 // pred_region
      %s47 = ssub.s32 16384, 16384
      %48 = vsyncadd [#allocation6], %s47
      %s49 = sshll.u32 [#allocation7], 4
      %s50 = int_to_ptr.vmem [resolvable:$true] %s49
      %55 = dma.hbm_to_vmem [thread:$0]  %s4, 16384, %s50, [#allocation6], 256, 256, 16
    $region21: #{tpu_custom_call.1} parent=1 // pred_fallthru
      _
    // Predicated region
    $region22: #{tpu_custom_call.1} parent=1 // pred_check
      _
    $region23: #{tpu_custom_call.1} parent=1 // pred_check_branch
      %57 = sbr.rel (0) target = $region25
    $region24: #{tpu_custom_call.1} parent=1 // pred_region
      _
    $region25: #{tpu_custom_call.1} parent=1 // pred_fallthru
      _
    // Predicated region
    $region26: #{tpu_custom_call.1} parent=1 // pred_check
      _
    $region27: #{tpu_custom_call.1} parent=1 // pred_check_branch
      %59 = sbr.rel (0) target = $region29
    $region28: #{tpu_custom_call.1} parent=1 // pred_region
      _
    $region29: #{tpu_custom_call.1} parent=1 // pred_fallthru
      _
    // Predicated region
    $region30: #{tpu_custom_call.1} parent=1 // pred_check
      _
    $region31: #{tpu_custom_call.1} parent=1 // pred_check_branch
      %61 = sbr.rel (0) target = $region33
    $region32: #{tpu_custom_call.1} parent=1 // pred_region
      %s63 = ssub.s32 4096, 4096
      %64 = vsyncadd [#allocation9], %s63
      %s65 = sshll.u32 [#allocation8], 4
      %s66 = int_to_ptr.vmem [resolvable:$true] %s65
      %71 = dma.hbm_to_vmem [thread:$0]  %s7, 4096, %s66, [#allocation9], 64, 64, 4
    $region33: #{tpu_custom_call.1} parent=1 // pred_fallthru
      _
    // Predicated region
    $region34: #{tpu_custom_call.1} parent=1 // pred_check
      _
    $region35: #{tpu_custom_call.1} parent=1 // pred_check_branch
      %73 = sbr.rel (0) target = $region37
    $region36: #{tpu_custom_call.1} parent=1 // pred_region
      _
    $region37: #{tpu_custom_call.1} parent=1 // pred_fallthru
      _
    // Predicated region
    $region38: #{tpu_custom_call.1} parent=1 // pred_check
      _
    $region39: #{tpu_custom_call.1} parent=1 // pred_check_branch
      %75 = sbr.rel (0) target = $region41
    $region40: #{tpu_custom_call.1} parent=1 // pred_region
      %76 = dma.done [#allocation3], 448
    $region41: #{tpu_custom_call.1} parent=1 // pred_fallthru
      _
    // Predicated region
    $region42: #{tpu_custom_call.1} parent=1 // pred_check
      _
    $region43: #{tpu_custom_call.1} parent=1 // pred_check_branch
      %78 = sbr.rel (0) target = $region45
    $region44: #{tpu_custom_call.1} parent=1 // pred_region
      %79 = dma.done [#allocation6], 25088
    $region45: #{tpu_custom_call.1} parent=1 // pred_fallthru
      _
    // Predicated region
    $region46: #{tpu_custom_call.1} parent=1 // pred_check
      _
    $region47: #{tpu_custom_call.1} parent=1 // pred_check_branch
      %81 = sbr.rel (0) target = $region49
    $region48: #{tpu_custom_call.1} parent=1 // pred_region
      %82 = dma.done [#allocation6], 16384
    $region49: #{tpu_custom_call.1} parent=1 // pred_fallthru
      _
    // Predicated region
    $region50: #{tpu_custom_call.1} parent=1 // pred_check
      _
    $region51: #{tpu_custom_call.1} parent=1 // pred_check_branch
      %84 = sbr.rel (0) target = $region53
    $region52: #{tpu_custom_call.1} parent=1 // pred_region
      %85 = dma.done [#allocation9], 4096
    $region53: #{tpu_custom_call.1} parent=1 // pred_fallthru
      _
    %v87 = vld [vmem:[#allocation2] sm:$0xff]
    %v88 = vld [vmem:[#allocation2 + $0x8] sm:$0xff]
    %v89 = vld [vmem:[#allocation2 + $0x10] sm:$0xff]
    %v90 = vld [vmem:[#allocation2 + $0x18] sm:$0xf]
    %v91 = vld [vmem:[#allocation5] sm:$0xff]
    %v92 = vld [vmem:[#allocation5 + $0x8] sm:$0xff]
    %v93 = vld [vmem:[#allocation5 + $0x10] sm:$0xff]
    %v94 = vld [vmem:[#allocation5 + $0x18] sm:$0xff]
    %v95 = vld [vmem:[#allocation5 + $0x20] sm:$0xff]
    %v96 = vld [vmem:[#allocation5 + $0x28] sm:$0xff]
    %v97 = vld [vmem:[#allocation5 + $0x30] sm:$0xff]
    %v98 = vld [vmem:[#allocation5 + $0x38] sm:$0xff]
    %v99 = vld [vmem:[#allocation5 + $0x40] sm:$0xff]
    %v100 = vld [vmem:[#allocation5 + $0x48] sm:$0xff]
    %v101 = vld [vmem:[#allocation5 + $0x50] sm:$0xff]
    %v102 = vld [vmem:[#allocation5 + $0x58] sm:$0xff]
    %v103 = vld [vmem:[#allocation5 + $0x60] sm:$0xff]
    %v104 = vld [vmem:[#allocation5 + $0x68] sm:$0xff]
    %v105 = vld [vmem:[#allocation5 + $0x70] sm:$0xff]
    %v106 = vld [vmem:[#allocation5 + $0x78] sm:$0xff]
    %v107 = vld [vmem:[#allocation5 + $0x80] sm:$0xff]
    %v108 = vld [vmem:[#allocation5 + $0x88] sm:$0xff]
    %v109 = vld [vmem:[#allocation5 + $0x90] sm:$0xff]
    %v110 = vld [vmem:[#allocation5 + $0x98] sm:$0xff]
    %v111 = vld [vmem:[#allocation5 + $0xa0] sm:$0xff]
    %v112 = vld [vmem:[#allocation5 + $0xa8] sm:$0xff]
    %v113 = vld [vmem:[#allocation5 + $0xb0] sm:$0xff]
    %v114 = vld [vmem:[#allocation5 + $0xb8] sm:$0xff]
    %v115 = vld [vmem:[#allocation5 + $0xc0] sm:$0xff]
    %v116 = vld [vmem:[#allocation5 + $0xc8] sm:$0xff]
    %v117 = vld [vmem:[#allocation5 + $0xd0] sm:$0xff]
    %v118 = vld [vmem:[#allocation5 + $0xd8] sm:$0xff]
    %v119 = vld [vmem:[#allocation5 + $0xe0] sm:$0xff]
    %v120 = vld [vmem:[#allocation5 + $0xe8] sm:$0xff]
    %v121 = vld [vmem:[#allocation5 + $0xf0] sm:$0xff]
    %v122 = vld [vmem:[#allocation5 + $0xf8] sm:$0xff]
    %v123 = vld [vmem:[#allocation5 + $0x100] sm:$0xff]
    %v124 = vld [vmem:[#allocation5 + $0x108] sm:$0xff]
    %v125 = vld [vmem:[#allocation5 + $0x110] sm:$0xff]
    %v126 = vld [vmem:[#allocation5 + $0x118] sm:$0xff]
    %v127 = vld [vmem:[#allocation5 + $0x120] sm:$0xff]
    %v128 = vld [vmem:[#allocation5 + $0x128] sm:$0xff]
    %v129 = vld [vmem:[#allocation5 + $0x130] sm:$0xff]
    %v130 = vld [vmem:[#allocation5 + $0x138] sm:$0xff]
    %v131 = vld [vmem:[#allocation5 + $0x140] sm:$0xff]
    %v132 = vld [vmem:[#allocation5 + $0x148] sm:$0xff]
    %v133 = vld [vmem:[#allocation5 + $0x150] sm:$0xff]
    %v134 = vld [vmem:[#allocation5 + $0x158] sm:$0xff]
    %v135 = vld [vmem:[#allocation5 + $0x160] sm:$0xff]
    %v136 = vld [vmem:[#allocation5 + $0x168] sm:$0xff]
    %v137 = vld [vmem:[#allocation5 + $0x170] sm:$0xff]
    %v138 = vld [vmem:[#allocation5 + $0x178] sm:$0xff]
    %v139 = vld [vmem:[#allocation5 + $0x180] sm:$0xff]
    %v140 = vld [vmem:[#allocation5 + $0x188] sm:$0xff]
    %v141 = vld [vmem:[#allocation5 + $0x190] sm:$0xff]
    %v142 = vld [vmem:[#allocation5 + $0x198] sm:$0xff]
    %v143 = vld [vmem:[#allocation5 + $0x1a0] sm:$0xff]
    %v144 = vld [vmem:[#allocation5 + $0x1a8] sm:$0xff]
    %v145 = vld [vmem:[#allocation5 + $0x1b0] sm:$0xff]
    %v146 = vld [vmem:[#allocation5 + $0x1b8] sm:$0xff]
    %v147 = vld [vmem:[#allocation5 + $0x1c0] sm:$0xff]
    %v148 = vld [vmem:[#allocation5 + $0x1c8] sm:$0xff]
    %v149 = vld [vmem:[#allocation5 + $0x1d0] sm:$0xff]
    %v150 = vld [vmem:[#allocation5 + $0x1d8] sm:$0xff]
    %v151 = vld [vmem:[#allocation5 + $0x1e0] sm:$0xff]
    %v152 = vld [vmem:[#allocation5 + $0x1e8] sm:$0xff]
    %v153 = vld [vmem:[#allocation5 + $0x1f0] sm:$0xff]
    %v154 = vld [vmem:[#allocation5 + $0x1f8] sm:$0xff]
    %v155 = vld [vmem:[#allocation5 + $0x200] sm:$0xff]
    %v156 = vld [vmem:[#allocation5 + $0x208] sm:$0xff]
    %v157 = vld [vmem:[#allocation5 + $0x210] sm:$0xff]
    %v158 = vld [vmem:[#allocation5 + $0x218] sm:$0xff]
    %v159 = vld [vmem:[#allocation5 + $0x220] sm:$0xff]
    %v160 = vld [vmem:[#allocation5 + $0x228] sm:$0xff]
    %v161 = vld [vmem:[#allocation5 + $0x230] sm:$0xff]
    %v162 = vld [vmem:[#allocation5 + $0x238] sm:$0xff]
    %v163 = vld [vmem:[#allocation5 + $0x240] sm:$0xff]
    %v164 = vld [vmem:[#allocation5 + $0x248] sm:$0xff]
    %v165 = vld [vmem:[#allocation5 + $0x250] sm:$0xff]
    %v166 = vld [vmem:[#allocation5 + $0x258] sm:$0xff]
    %v167 = vld [vmem:[#allocation5 + $0x260] sm:$0xff]
    %v168 = vld [vmem:[#allocation5 + $0x268] sm:$0xff]
    %v169 = vld [vmem:[#allocation5 + $0x270] sm:$0xff]
    %v170 = vld [vmem:[#allocation5 + $0x278] sm:$0xff]
    %v171 = vld [vmem:[#allocation5 + $0x280] sm:$0xff]
    %v172 = vld [vmem:[#allocation5 + $0x288] sm:$0xff]
    %v173 = vld [vmem:[#allocation5 + $0x290] sm:$0xff]
    %v174 = vld [vmem:[#allocation5 + $0x298] sm:$0xff]
    %v175 = vld [vmem:[#allocation5 + $0x2a0] sm:$0xff]
    %v176 = vld [vmem:[#allocation5 + $0x2a8] sm:$0xff]
    %v177 = vld [vmem:[#allocation5 + $0x2b0] sm:$0xff]
    %v178 = vld [vmem:[#allocation5 + $0x2b8] sm:$0xff]
    %v179 = vld [vmem:[#allocation5 + $0x2c0] sm:$0xff]
    %v180 = vld [vmem:[#allocation5 + $0x2c8] sm:$0xff]
    %v181 = vld [vmem:[#allocation5 + $0x2d0] sm:$0xff]
    %v182 = vld [vmem:[#allocation5 + $0x2d8] sm:$0xff]
    %v183 = vld [vmem:[#allocation5 + $0x2e0] sm:$0xff]
    %v184 = vld [vmem:[#allocation5 + $0x2e8] sm:$0xff]
    %v185 = vld [vmem:[#allocation5 + $0x2f0] sm:$0xff]
    %v186 = vld [vmem:[#allocation5 + $0x2f8] sm:$0xff]
    %v187 = vld [vmem:[#allocation5 + $0x300] sm:$0xff]
    %v188 = vld [vmem:[#allocation5 + $0x308] sm:$0xff]
    %v189 = vld [vmem:[#allocation5 + $0x310] sm:$0xff]
    %v190 = vld [vmem:[#allocation5 + $0x318] sm:$0xff]
    %v191 = vld [vmem:[#allocation5 + $0x320] sm:$0xff]
    %v192 = vld [vmem:[#allocation5 + $0x328] sm:$0xff]
    %v193 = vld [vmem:[#allocation5 + $0x330] sm:$0xff]
    %v194 = vld [vmem:[#allocation5 + $0x338] sm:$0xff]
    %v195 = vld [vmem:[#allocation5 + $0x340] sm:$0xff]
    %v196 = vld [vmem:[#allocation5 + $0x348] sm:$0xff]
    %v197 = vld [vmem:[#allocation5 + $0x350] sm:$0xff]
    %v198 = vld [vmem:[#allocation5 + $0x358] sm:$0xff]
    %v199 = vld [vmem:[#allocation5 + $0x360] sm:$0xff]
    %v200 = vld [vmem:[#allocation5 + $0x368] sm:$0xff]
    %v201 = vld [vmem:[#allocation5 + $0x370] sm:$0xff]
    %v202 = vld [vmem:[#allocation5 + $0x378] sm:$0xff]
    %v203 = vld [vmem:[#allocation5 + $0x380] sm:$0xff]
    %v204 = vld [vmem:[#allocation5 + $0x388] sm:$0xff]
    %v205 = vld [vmem:[#allocation5 + $0x390] sm:$0xff]
    %v206 = vld [vmem:[#allocation5 + $0x398] sm:$0xff]
    %v207 = vld [vmem:[#allocation5 + $0x3a0] sm:$0xff]
    %v208 = vld [vmem:[#allocation5 + $0x3a8] sm:$0xff]
    %v209 = vld [vmem:[#allocation5 + $0x3b0] sm:$0xff]
    %v210 = vld [vmem:[#allocation5 + $0x3b8] sm:$0xff]
    %v211 = vld [vmem:[#allocation5 + $0x3c0] sm:$0xff]
    %v212 = vld [vmem:[#allocation5 + $0x3c8] sm:$0xff]
    %v213 = vld [vmem:[#allocation5 + $0x3d0] sm:$0xff]
    %v214 = vld [vmem:[#allocation5 + $0x3d8] sm:$0xff]
    %v215 = vld [vmem:[#allocation5 + $0x3e0] sm:$0xff]
    %v216 = vld [vmem:[#allocation5 + $0x3e8] sm:$0xff]
    %v217 = vld [vmem:[#allocation5 + $0x3f0] sm:$0xff]
    %v218 = vld [vmem:[#allocation5 + $0x3f8] sm:$0xff]
    %v219 = vld [vmem:[#allocation5 + $0x400] sm:$0xff]
    %v220 = vld [vmem:[#allocation5 + $0x408] sm:$0xff]
    %v221 = vld [vmem:[#allocation5 + $0x410] sm:$0xff]
    %v222 = vld [vmem:[#allocation5 + $0x418] sm:$0xff]
    %v223 = vld [vmem:[#allocation5 + $0x420] sm:$0xff]
    %v224 = vld [vmem:[#allocation5 + $0x428] sm:$0xff]
    %v225 = vld [vmem:[#allocation5 + $0x430] sm:$0xff]
    %v226 = vld [vmem:[#allocation5 + $0x438] sm:$0xff]
    %v227 = vld [vmem:[#allocation5 + $0x440] sm:$0xff]
    %v228 = vld [vmem:[#allocation5 + $0x448] sm:$0xff]
    %v229 = vld [vmem:[#allocation5 + $0x450] sm:$0xff]
    %v230 = vld [vmem:[#allocation5 + $0x458] sm:$0xff]
    %v231 = vld [vmem:[#allocation5 + $0x460] sm:$0xff]
    %v232 = vld [vmem:[#allocation5 + $0x468] sm:$0xff]
    %v233 = vld [vmem:[#allocation5 + $0x470] sm:$0xff]
    %v234 = vld [vmem:[#allocation5 + $0x478] sm:$0xff]
    %v235 = vld [vmem:[#allocation5 + $0x480] sm:$0xff]
    %v236 = vld [vmem:[#allocation5 + $0x488] sm:$0xff]
    %v237 = vld [vmem:[#allocation5 + $0x490] sm:$0xff]
    %v238 = vld [vmem:[#allocation5 + $0x498] sm:$0xff]
    %v239 = vld [vmem:[#allocation5 + $0x4a0] sm:$0xff]
    %v240 = vld [vmem:[#allocation5 + $0x4a8] sm:$0xff]
    %v241 = vld [vmem:[#allocation5 + $0x4b0] sm:$0xff]
    %v242 = vld [vmem:[#allocation5 + $0x4b8] sm:$0xff]
    %v243 = vld [vmem:[#allocation5 + $0x4c0] sm:$0xff]
    %v244 = vld [vmem:[#allocation5 + $0x4c8] sm:$0xff]
    %v245 = vld [vmem:[#allocation5 + $0x4d0] sm:$0xff]
    %v246 = vld [vmem:[#allocation5 + $0x4d8] sm:$0xff]
    %v247 = vld [vmem:[#allocation5 + $0x4e0] sm:$0xff]
    %v248 = vld [vmem:[#allocation5 + $0x4e8] sm:$0xff]
    %v249 = vld [vmem:[#allocation5 + $0x4f0] sm:$0xff]
    %v250 = vld [vmem:[#allocation5 + $0x4f8] sm:$0xff]
    %v251 = vld [vmem:[#allocation5 + $0x500] sm:$0xff]
    %v252 = vld [vmem:[#allocation5 + $0x508] sm:$0xff]
    %v253 = vld [vmem:[#allocation5 + $0x510] sm:$0xff]
    %v254 = vld [vmem:[#allocation5 + $0x518] sm:$0xff]
    %v255 = vld [vmem:[#allocation5 + $0x520] sm:$0xff]
    %v256 = vld [vmem:[#allocation5 + $0x528] sm:$0xff]
    %v257 = vld [vmem:[#allocation5 + $0x530] sm:$0xff]
    %v258 = vld [vmem:[#allocation5 + $0x538] sm:$0xff]
    %v259 = vld [vmem:[#allocation5 + $0x540] sm:$0xff]
    %v260 = vld [vmem:[#allocation5 + $0x548] sm:$0xff]
    %v261 = vld [vmem:[#allocation5 + $0x550] sm:$0xff]
    %v262 = vld [vmem:[#allocation5 + $0x558] sm:$0xff]
    %v263 = vld [vmem:[#allocation5 + $0x560] sm:$0xff]
    %v264 = vld [vmem:[#allocation5 + $0x568] sm:$0xff]
    %v265 = vld [vmem:[#allocation5 + $0x570] sm:$0xff]
    %v266 = vld [vmem:[#allocation5 + $0x578] sm:$0xff]
    %v267 = vld [vmem:[#allocation5 + $0x580] sm:$0xff]
    %v268 = vld [vmem:[#allocation5 + $0x588] sm:$0xff]
    %v269 = vld [vmem:[#allocation5 + $0x590] sm:$0xff]
    %v270 = vld [vmem:[#allocation5 + $0x598] sm:$0xff]
    %v271 = vld [vmem:[#allocation5 + $0x5a0] sm:$0xff]
    %v272 = vld [vmem:[#allocation5 + $0x5a8] sm:$0xff]
    %v273 = vld [vmem:[#allocation5 + $0x5b0] sm:$0xff]
    %v274 = vld [vmem:[#allocation5 + $0x5b8] sm:$0xff]
    %v275 = vld [vmem:[#allocation5 + $0x5c0] sm:$0xff]
    %v276 = vld [vmem:[#allocation5 + $0x5c8] sm:$0xff]
    %v277 = vld [vmem:[#allocation5 + $0x5d0] sm:$0xff]
    %v278 = vld [vmem:[#allocation5 + $0x5d8] sm:$0xff]
    %v279 = vld [vmem:[#allocation5 + $0x5e0] sm:$0xff]
    %v280 = vld [vmem:[#allocation5 + $0x5e8] sm:$0xff]
    %v281 = vld [vmem:[#allocation5 + $0x5f0] sm:$0xff]
    %v282 = vld [vmem:[#allocation5 + $0x5f8] sm:$0xff]
    %v283 = vld [vmem:[#allocation5 + $0x600] sm:$0xff]
    %v284 = vld [vmem:[#allocation5 + $0x608] sm:$0xff]
    %v285 = vld [vmem:[#allocation5 + $0x610] sm:$0xff]
    %v286 = vld [vmem:[#allocation5 + $0x618] sm:$0xff]
    %v291 = vunpack.c.l.b16 %v87
    %v292 = vunpack.c.h.b16 %v87
    %v293 = vunpack.c.l.b16 %v88
    %v294 = vunpack.c.h.b16 %v88
    %v295 = vunpack.c.l.b16 %v89
    %v296 = vunpack.c.h.b16 %v89
    %v297 = vunpack.c.l.b16 %v90
    %v298 = vpack.c.b16 %v291, %v291
    %v299 = vpack.c.b16 %v292, %v292
    %v300 = vpack.c.b16 %v293, %v293
    %v301 = vpack.c.b16 %v294, %v294
    %v302 = vpack.c.b16 %v295, %v295
    %v303 = vpack.c.b16 %v296, %v296
    %v304 = vpack.c.b16 %v297, %v297
    %v507 = vunpack.c.l.b16 %v91
    %v508 = vunpack.c.h.b16 %v91
    %v509 = vunpack.c.l.b16 %v92
    %v510 = vunpack.c.h.b16 %v92
    %v511 = vunpack.c.l.b16 %v93
    %v512 = vunpack.c.h.b16 %v93
    %v513 = vunpack.c.l.b16 %v94
    %v514 = vunpack.c.h.b16 %v94
    %v515 = vunpack.c.l.b16 %v95
    %v516 = vunpack.c.h.b16 %v95
    %v517 = vunpack.c.l.b16 %v96
    %v518 = vunpack.c.h.b16 %v96
    %v519 = vunpack.c.l.b16 %v97
    %v520 = vunpack.c.h.b16 %v97
    %v521 = vunpack.c.l.b16 %v98
    %v522 = vunpack.c.h.b16 %v98
    %v523 = vunpack.c.l.b16 %v99
    %v524 = vunpack.c.h.b16 %v99
    %v525 = vunpack.c.l.b16 %v100
    %v526 = vunpack.c.h.b16 %v100
    %v527 = vunpack.c.l.b16 %v101
    %v528 = vunpack.c.h.b16 %v101
    %v529 = vunpack.c.l.b16 %v102
    %v530 = vunpack.c.h.b16 %v102
    %v531 = vunpack.c.l.b16 %v103
    %v532 = vunpack.c.h.b16 %v103
    %v533 = vunpack.c.l.b16 %v104
    %v534 = vunpack.c.h.b16 %v104
    %v535 = vunpack.c.l.b16 %v105
    %v536 = vunpack.c.h.b16 %v105
    %v537 = vunpack.c.l.b16 %v106
    %v538 = vunpack.c.h.b16 %v106
    %v539 = vunpack.c.l.b16 %v107
    %v540 = vunpack.c.h.b16 %v107
    %v541 = vunpack.c.l.b16 %v108
    %v542 = vunpack.c.h.b16 %v108
    %v543 = vunpack.c.l.b16 %v109
    %v544 = vunpack.c.h.b16 %v109
    %v545 = vunpack.c.l.b16 %v110
    %v546 = vunpack.c.h.b16 %v110
    %v547 = vunpack.c.l.b16 %v111
    %v548 = vunpack.c.h.b16 %v111
    %v549 = vunpack.c.l.b16 %v112
    %v550 = vunpack.c.h.b16 %v112
    %v551 = vunpack.c.l.b16 %v113
    %v552 = vunpack.c.h.b16 %v113
    %v553 = vunpack.c.l.b16 %v114
    %v554 = vunpack.c.h.b16 %v114
    %v555 = vunpack.c.l.b16 %v115
    %v556 = vunpack.c.h.b16 %v115
    %v557 = vunpack.c.l.b16 %v116
    %v558 = vunpack.c.h.b16 %v116
    %v559 = vunpack.c.l.b16 %v117
    %v560 = vunpack.c.h.b16 %v117
    %v561 = vunpack.c.l.b16 %v118
    %v562 = vunpack.c.h.b16 %v118
    %v563 = vunpack.c.l.b16 %v119
    %v564 = vunpack.c.h.b16 %v119
    %v565 = vunpack.c.l.b16 %v120
    %v566 = vunpack.c.h.b16 %v120
    %v567 = vunpack.c.l.b16 %v121
    %v568 = vunpack.c.h.b16 %v121
    %v569 = vunpack.c.l.b16 %v122
    %v570 = vunpack.c.h.b16 %v122
    %v571 = vunpack.c.l.b16 %v123
    %v572 = vunpack.c.h.b16 %v123
    %v573 = vunpack.c.l.b16 %v124
    %v574 = vunpack.c.h.b16 %v124
    %v575 = vunpack.c.l.b16 %v125
    %v576 = vunpack.c.h.b16 %v125
    %v577 = vunpack.c.l.b16 %v126
    %v578 = vunpack.c.h.b16 %v126
    %v579 = vunpack.c.l.b16 %v127
    %v580 = vunpack.c.h.b16 %v127
    %v581 = vunpack.c.l.b16 %v128
    %v582 = vunpack.c.h.b16 %v128
    %v583 = vunpack.c.l.b16 %v129
    %v584 = vunpack.c.h.b16 %v129
    %v585 = vunpack.c.l.b16 %v130
    %v586 = vunpack.c.h.b16 %v130
    %v587 = vunpack.c.l.b16 %v131
    %v588 = vunpack.c.h.b16 %v131
    %v589 = vunpack.c.l.b16 %v132
    %v590 = vunpack.c.h.b16 %v132
    %v591 = vunpack.c.l.b16 %v133
    %v592 = vunpack.c.h.b16 %v133
    %v593 = vunpack.c.l.b16 %v134
    %v594 = vunpack.c.h.b16 %v134
    %v595 = vunpack.c.l.b16 %v135
    %v596 = vunpack.c.h.b16 %v135
    %v597 = vunpack.c.l.b16 %v136
    %v598 = vunpack.c.h.b16 %v136
    %v599 = vunpack.c.l.b16 %v137
    %v600 = vunpack.c.h.b16 %v137
    %v601 = vunpack.c.l.b16 %v138
    %v602 = vunpack.c.h.b16 %v138
    %v603 = vunpack.c.l.b16 %v139
    %v604 = vunpack.c.h.b16 %v139
    %v605 = vunpack.c.l.b16 %v140
    %v606 = vunpack.c.h.b16 %v140
    %v607 = vunpack.c.l.b16 %v141
    %v608 = vunpack.c.h.b16 %v141
    %v609 = vunpack.c.l.b16 %v142
    %v610 = vunpack.c.h.b16 %v142
    %v611 = vunpack.c.l.b16 %v143
    %v612 = vunpack.c.h.b16 %v143
    %v613 = vunpack.c.l.b16 %v144
    %v614 = vunpack.c.h.b16 %v144
    %v615 = vunpack.c.l.b16 %v145
    %v616 = vunpack.c.h.b16 %v145
    %v617 = vunpack.c.l.b16 %v146
    %v618 = vunpack.c.h.b16 %v146
    %v619 = vunpack.c.l.b16 %v147
    %v620 = vunpack.c.h.b16 %v147
    %v621 = vunpack.c.l.b16 %v148
    %v622 = vunpack.c.h.b16 %v148
    %v623 = vunpack.c.l.b16 %v149
    %v624 = vunpack.c.h.b16 %v149
    %v625 = vunpack.c.l.b16 %v150
    %v626 = vunpack.c.h.b16 %v150
    %v627 = vunpack.c.l.b16 %v151
    %v628 = vunpack.c.h.b16 %v151
    %v629 = vunpack.c.l.b16 %v152
    %v630 = vunpack.c.h.b16 %v152
    %v631 = vunpack.c.l.b16 %v153
    %v632 = vunpack.c.h.b16 %v153
    %v633 = vunpack.c.l.b16 %v154
    %v634 = vunpack.c.h.b16 %v154
    %v635 = vunpack.c.l.b16 %v155
    %v636 = vunpack.c.h.b16 %v155
    %v637 = vunpack.c.l.b16 %v156
    %v638 = vunpack.c.h.b16 %v156
    %v639 = vunpack.c.l.b16 %v157
    %v640 = vunpack.c.h.b16 %v157
    %v641 = vunpack.c.l.b16 %v158
    %v642 = vunpack.c.h.b16 %v158
    %v643 = vunpack.c.l.b16 %v159
    %v644 = vunpack.c.h.b16 %v159
    %v645 = vunpack.c.l.b16 %v160
    %v646 = vunpack.c.h.b16 %v160
    %v647 = vunpack.c.l.b16 %v161
    %v648 = vunpack.c.h.b16 %v161
    %v649 = vunpack.c.l.b16 %v162
    %v650 = vunpack.c.h.b16 %v162
    %v651 = vunpack.c.l.b16 %v163
    %v652 = vunpack.c.h.b16 %v163
    %v653 = vunpack.c.l.b16 %v164
    %v654 = vunpack.c.h.b16 %v164
    %v655 = vunpack.c.l.b16 %v165
    %v656 = vunpack.c.h.b16 %v165
    %v657 = vunpack.c.l.b16 %v166
    %v658 = vunpack.c.h.b16 %v166
    %v659 = vunpack.c.l.b16 %v167
    %v660 = vunpack.c.h.b16 %v167
    %v661 = vunpack.c.l.b16 %v168
    %v662 = vunpack.c.h.b16 %v168
    %v663 = vunpack.c.l.b16 %v169
    %v664 = vunpack.c.h.b16 %v169
    %v665 = vunpack.c.l.b16 %v170
    %v666 = vunpack.c.h.b16 %v170
    %v667 = vunpack.c.l.b16 %v171
    %v668 = vunpack.c.h.b16 %v171
    %v669 = vunpack.c.l.b16 %v172
    %v670 = vunpack.c.h.b16 %v172
    %v671 = vunpack.c.l.b16 %v173
    %v672 = vunpack.c.h.b16 %v173
    %v673 = vunpack.c.l.b16 %v174
    %v674 = vunpack.c.h.b16 %v174
    %v675 = vunpack.c.l.b16 %v175
    %v676 = vunpack.c.h.b16 %v175
    %v677 = vunpack.c.l.b16 %v176
    %v678 = vunpack.c.h.b16 %v176
    %v679 = vunpack.c.l.b16 %v177
    %v680 = vunpack.c.h.b16 %v177
    %v681 = vunpack.c.l.b16 %v178
    %v682 = vunpack.c.h.b16 %v178
    %v683 = vunpack.c.l.b16 %v179
    %v684 = vunpack.c.h.b16 %v179
    %v685 = vunpack.c.l.b16 %v180
    %v686 = vunpack.c.h.b16 %v180
    %v687 = vunpack.c.l.b16 %v181
    %v688 = vunpack.c.h.b16 %v181
    %v689 = vunpack.c.l.b16 %v182
    %v690 = vunpack.c.h.b16 %v182
    %v691 = vunpack.c.l.b16 %v183
    %v692 = vunpack.c.h.b16 %v183
    %v693 = vunpack.c.l.b16 %v184
    %v694 = vunpack.c.h.b16 %v184
    %v695 = vunpack.c.l.b16 %v185
    %v696 = vunpack.c.h.b16 %v185
    %v697 = vunpack.c.l.b16 %v186
    %v698 = vunpack.c.h.b16 %v186
    %v699 = vunpack.c.l.b16 %v187
    %v700 = vunpack.c.h.b16 %v187
    %v701 = vunpack.c.l.b16 %v188
    %v702 = vunpack.c.h.b16 %v188
    %v703 = vunpack.c.l.b16 %v189
    %v704 = vunpack.c.h.b16 %v189
    %v705 = vunpack.c.l.b16 %v190
    %v706 = vunpack.c.h.b16 %v190
    %v707 = vunpack.c.l.b16 %v191
    %v708 = vunpack.c.h.b16 %v191
    %v709 = vunpack.c.l.b16 %v192
    %v710 = vunpack.c.h.b16 %v192
    %v711 = vunpack.c.l.b16 %v193
    %v712 = vunpack.c.h.b16 %v193
    %v713 = vunpack.c.l.b16 %v194
    %v714 = vunpack.c.h.b16 %v194
    %v715 = vunpack.c.l.b16 %v195
    %v716 = vunpack.c.h.b16 %v195
    %v717 = vunpack.c.l.b16 %v196
    %v718 = vunpack.c.h.b16 %v196
    %v719 = vunpack.c.l.b16 %v197
    %v720 = vunpack.c.h.b16 %v197
    %v721 = vunpack.c.l.b16 %v198
    %v722 = vunpack.c.h.b16 %v198
    %v723 = vunpack.c.l.b16 %v199
    %v724 = vunpack.c.h.b16 %v199
    %v725 = vunpack.c.l.b16 %v200
    %v726 = vunpack.c.h.b16 %v200
    %v727 = vunpack.c.l.b16 %v201
    %v728 = vunpack.c.h.b16 %v201
    %v729 = vunpack.c.l.b16 %v202
    %v730 = vunpack.c.h.b16 %v202
    %v731 = vunpack.c.l.b16 %v203
    %v732 = vunpack.c.h.b16 %v203
    %v733 = vunpack.c.l.b16 %v204
    %v734 = vunpack.c.h.b16 %v204
    %v735 = vunpack.c.l.b16 %v205
    %v736 = vunpack.c.h.b16 %v205
    %v737 = vunpack.c.l.b16 %v206
    %v738 = vunpack.c.h.b16 %v206
    %v739 = vunpack.c.l.b16 %v207
    %v740 = vunpack.c.h.b16 %v207
    %v741 = vunpack.c.l.b16 %v208
    %v742 = vunpack.c.h.b16 %v208
    %v743 = vunpack.c.l.b16 %v209
    %v744 = vunpack.c.h.b16 %v209
    %v745 = vunpack.c.l.b16 %v210
    %v746 = vunpack.c.h.b16 %v210
    %v747 = vunpack.c.l.b16 %v211
    %v748 = vunpack.c.h.b16 %v211
    %v749 = vunpack.c.l.b16 %v212
    %v750 = vunpack.c.h.b16 %v212
    %v751 = vunpack.c.l.b16 %v213
    %v752 = vunpack.c.h.b16 %v213
    %v753 = vunpack.c.l.b16 %v214
    %v754 = vunpack.c.h.b16 %v214
    %v755 = vunpack.c.l.b16 %v215
    %v756 = vunpack.c.h.b16 %v215
    %v757 = vunpack.c.l.b16 %v216
    %v758 = vunpack.c.h.b16 %v216
    %v759 = vunpack.c.l.b16 %v217
    %v760 = vunpack.c.h.b16 %v217
    %v761 = vunpack.c.l.b16 %v218
    %v762 = vunpack.c.h.b16 %v218
    %v763 = vunpack.c.l.b16 %v219
    %v764 = vunpack.c.h.b16 %v219
    %v765 = vunpack.c.l.b16 %v220
    %v766 = vunpack.c.h.b16 %v220
    %v767 = vunpack.c.l.b16 %v221
    %v768 = vunpack.c.h.b16 %v221
    %v769 = vunpack.c.l.b16 %v222
    %v770 = vunpack.c.h.b16 %v222
    %v771 = vunpack.c.l.b16 %v223
    %v772 = vunpack.c.h.b16 %v223
    %v773 = vunpack.c.l.b16 %v224
    %v774 = vunpack.c.h.b16 %v224
    %v775 = vunpack.c.l.b16 %v225
    %v776 = vunpack.c.h.b16 %v225
    %v777 = vunpack.c.l.b16 %v226
    %v778 = vunpack.c.h.b16 %v226
    %v779 = vunpack.c.l.b16 %v227
    %v780 = vunpack.c.h.b16 %v227
    %v781 = vunpack.c.l.b16 %v228
    %v782 = vunpack.c.h.b16 %v228
    %v783 = vunpack.c.l.b16 %v229
    %v784 = vunpack.c.h.b16 %v229
    %v785 = vunpack.c.l.b16 %v230
    %v786 = vunpack.c.h.b16 %v230
    %v787 = vunpack.c.l.b16 %v231
    %v788 = vunpack.c.h.b16 %v231
    %v789 = vunpack.c.l.b16 %v232
    %v790 = vunpack.c.h.b16 %v232
    %v791 = vunpack.c.l.b16 %v233
    %v792 = vunpack.c.h.b16 %v233
    %v793 = vunpack.c.l.b16 %v234
    %v794 = vunpack.c.h.b16 %v234
    %v795 = vunpack.c.l.b16 %v235
    %v796 = vunpack.c.h.b16 %v235
    %v797 = vunpack.c.l.b16 %v236
    %v798 = vunpack.c.h.b16 %v236
    %v799 = vunpack.c.l.b16 %v237
    %v800 = vunpack.c.h.b16 %v237
    %v801 = vunpack.c.l.b16 %v238
    %v802 = vunpack.c.h.b16 %v238
    %v803 = vunpack.c.l.b16 %v239
    %v804 = vunpack.c.h.b16 %v239
    %v805 = vunpack.c.l.b16 %v240
    %v806 = vunpack.c.h.b16 %v240
    %v807 = vunpack.c.l.b16 %v241
    %v808 = vunpack.c.h.b16 %v241
    %v809 = vunpack.c.l.b16 %v242
    %v810 = vunpack.c.h.b16 %v242
    %v811 = vunpack.c.l.b16 %v243
    %v812 = vunpack.c.h.b16 %v243
    %v813 = vunpack.c.l.b16 %v244
    %v814 = vunpack.c.h.b16 %v244
    %v815 = vunpack.c.l.b16 %v245
    %v816 = vunpack.c.h.b16 %v245
    %v817 = vunpack.c.l.b16 %v246
    %v818 = vunpack.c.h.b16 %v246
    %v819 = vunpack.c.l.b16 %v247
    %v820 = vunpack.c.h.b16 %v247
    %v821 = vunpack.c.l.b16 %v248
    %v822 = vunpack.c.h.b16 %v248
    %v823 = vunpack.c.l.b16 %v249
    %v824 = vunpack.c.h.b16 %v249
    %v825 = vunpack.c.l.b16 %v250
    %v826 = vunpack.c.h.b16 %v250
    %v827 = vunpack.c.l.b16 %v251
    %v828 = vunpack.c.h.b16 %v251
    %v829 = vunpack.c.l.b16 %v252
    %v830 = vunpack.c.h.b16 %v252
    %v831 = vunpack.c.l.b16 %v253
    %v832 = vunpack.c.h.b16 %v253
    %v833 = vunpack.c.l.b16 %v254
    %v834 = vunpack.c.h.b16 %v254
    %v835 = vunpack.c.l.b16 %v255
    %v836 = vunpack.c.h.b16 %v255
    %v837 = vunpack.c.l.b16 %v256
    %v838 = vunpack.c.h.b16 %v256
    %v839 = vunpack.c.l.b16 %v257
    %v840 = vunpack.c.h.b16 %v257
    %v841 = vunpack.c.l.b16 %v258
    %v842 = vunpack.c.h.b16 %v258
    %v843 = vunpack.c.l.b16 %v259
    %v844 = vunpack.c.h.b16 %v259
    %v845 = vunpack.c.l.b16 %v260
    %v846 = vunpack.c.h.b16 %v260
    %v847 = vunpack.c.l.b16 %v261
    %v848 = vunpack.c.h.b16 %v261
    %v849 = vunpack.c.l.b16 %v262
    %v850 = vunpack.c.h.b16 %v262
    %v851 = vunpack.c.l.b16 %v263
    %v852 = vunpack.c.h.b16 %v263
    %v853 = vunpack.c.l.b16 %v264
    %v854 = vunpack.c.h.b16 %v264
    %v855 = vunpack.c.l.b16 %v265
    %v856 = vunpack.c.h.b16 %v265
    %v857 = vunpack.c.l.b16 %v266
    %v858 = vunpack.c.h.b16 %v266
    %v859 = vunpack.c.l.b16 %v267
    %v860 = vunpack.c.h.b16 %v267
    %v861 = vunpack.c.l.b16 %v268
    %v862 = vunpack.c.h.b16 %v268
    %v863 = vunpack.c.l.b16 %v269
    %v864 = vunpack.c.h.b16 %v269
    %v865 = vunpack.c.l.b16 %v270
    %v866 = vunpack.c.h.b16 %v270
    %v867 = vunpack.c.l.b16 %v271
    %v868 = vunpack.c.h.b16 %v271
    %v869 = vunpack.c.l.b16 %v272
    %v870 = vunpack.c.h.b16 %v272
    %v871 = vunpack.c.l.b16 %v273
    %v872 = vunpack.c.h.b16 %v273
    %v873 = vunpack.c.l.b16 %v274
    %v874 = vunpack.c.h.b16 %v274
    %v875 = vunpack.c.l.b16 %v275
    %v876 = vunpack.c.h.b16 %v275
    %v877 = vunpack.c.l.b16 %v276
    %v878 = vunpack.c.h.b16 %v276
    %v879 = vunpack.c.l.b16 %v277
    %v880 = vunpack.c.h.b16 %v277
    %v881 = vunpack.c.l.b16 %v278
    %v882 = vunpack.c.h.b16 %v278
    %v883 = vunpack.c.l.b16 %v279
    %v884 = vunpack.c.h.b16 %v279
    %v885 = vunpack.c.l.b16 %v280
    %v886 = vunpack.c.h.b16 %v280
    %v887 = vunpack.c.l.b16 %v281
    %v888 = vunpack.c.h.b16 %v281
    %v889 = vunpack.c.l.b16 %v282
    %v890 = vunpack.c.h.b16 %v282
    %v891 = vunpack.c.l.b16 %v283
    %v892 = vunpack.c.h.b16 %v283
    %v893 = vunpack.c.l.b16 %v284
    %v894 = vunpack.c.h.b16 %v284
    %v895 = vunpack.c.l.b16 %v285
    %v896 = vunpack.c.h.b16 %v285
    %v897 = vunpack.c.l.b16 %v286
    %v898 = vunpack.c.h.b16 %v286
    %v899 = vpack.c.b16 %v511, %v507
    %v900 = vpack.c.b16 %v512, %v508
    %v901 = vpack.c.b16 %v513, %v509
    %v902 = vpack.c.b16 %v514, %v510
    %v903 = vpack.c.b16 %v519, %v515
    %v904 = vpack.c.b16 %v520, %v516
    %v905 = vpack.c.b16 %v521, %v517
    %v906 = vpack.c.b16 %v522, %v518
    %v907 = vpack.c.b16 %v527, %v523
    %v908 = vpack.c.b16 %v528, %v524
    %v909 = vpack.c.b16 %v529, %v525
    %v910 = vpack.c.b16 %v530, %v526
    %v911 = vpack.c.b16 %v535, %v531
    %v912 = vpack.c.b16 %v536, %v532
    %v913 = vpack.c.b16 %v537, %v533
    %v914 = vpack.c.b16 %v538, %v534
    %v915 = vpack.c.b16 %v543, %v539
    %v916 = vpack.c.b16 %v544, %v540
    %v917 = vpack.c.b16 %v545, %v541
    %v918 = vpack.c.b16 %v546, %v542
    %v919 = vpack.c.b16 %v551, %v547
    %v920 = vpack.c.b16 %v552, %v548
    %v921 = vpack.c.b16 %v553, %v549
    %v922 = vpack.c.b16 %v554, %v550
    %v923 = vpack.c.b16 %v559, %v555
    %v924 = vpack.c.b16 %v560, %v556
    %v925 = vpack.c.b16 %v561, %v557
    %v926 = vpack.c.b16 %v562, %v558
    %v927 = vpack.c.b16 %v567, %v563
    %v928 = vpack.c.b16 %v568, %v564
    %v929 = vpack.c.b16 %v569, %v565
    %v930 = vpack.c.b16 %v570, %v566
    %v931 = vpack.c.b16 %v575, %v571
    %v932 = vpack.c.b16 %v576, %v572
    %v933 = vpack.c.b16 %v577, %v573
    %v934 = vpack.c.b16 %v578, %v574
    %v935 = vpack.c.b16 %v583, %v579
    %v936 = vpack.c.b16 %v584, %v580
    %v937 = vpack.c.b16 %v585, %v581
    %v938 = vpack.c.b16 %v586, %v582
    %v939 = vpack.c.b16 %v591, %v587
    %v940 = vpack.c.b16 %v592, %v588
    %v941 = vpack.c.b16 %v593, %v589
    %v942 = vpack.c.b16 %v594, %v590
    %v943 = vpack.c.b16 %v599, %v595
    %v944 = vpack.c.b16 %v600, %v596
    %v945 = vpack.c.b16 %v601, %v597
    %v946 = vpack.c.b16 %v602, %v598
    %v947 = vpack.c.b16 %v607, %v603
    %v948 = vpack.c.b16 %v608, %v604
    %v949 = vpack.c.b16 %v609, %v605
    %v950 = vpack.c.b16 %v610, %v606
    %v951 = vpack.c.b16 %v615, %v611
    %v952 = vpack.c.b16 %v616, %v612
    %v953 = vpack.c.b16 %v617, %v613
    %v954 = vpack.c.b16 %v618, %v614
    %v955 = vpack.c.b16 %v623, %v619
    %v956 = vpack.c.b16 %v624, %v620
    %v957 = vpack.c.b16 %v625, %v621
    %v958 = vpack.c.b16 %v626, %v622
    %v959 = vpack.c.b16 %v631, %v627
    %v960 = vpack.c.b16 %v632, %v628
    %v961 = vpack.c.b16 %v633, %v629
    %v962 = vpack.c.b16 %v634, %v630
    %v963 = vpack.c.b16 %v639, %v635
    %v964 = vpack.c.b16 %v640, %v636
    %v965 = vpack.c.b16 %v641, %v637
    %v966 = vpack.c.b16 %v642, %v638
    %v967 = vpack.c.b16 %v647, %v643
    %v968 = vpack.c.b16 %v648, %v644
    %v969 = vpack.c.b16 %v649, %v645
    %v970 = vpack.c.b16 %v650, %v646
    %v971 = vpack.c.b16 %v655, %v651
    %v972 = vpack.c.b16 %v656, %v652
    %v973 = vpack.c.b16 %v657, %v653
    %v974 = vpack.c.b16 %v658, %v654
    %v975 = vpack.c.b16 %v663, %v659
    %v976 = vpack.c.b16 %v664, %v660
    %v977 = vpack.c.b16 %v665, %v661
    %v978 = vpack.c.b16 %v666, %v662
    %v979 = vpack.c.b16 %v671, %v667
    %v980 = vpack.c.b16 %v672, %v668
    %v981 = vpack.c.b16 %v673, %v669
    %v982 = vpack.c.b16 %v674, %v670
    %v983 = vpack.c.b16 %v679, %v675
    %v984 = vpack.c.b16 %v680, %v676
    %v985 = vpack.c.b16 %v681, %v677
    %v986 = vpack.c.b16 %v682, %v678
    %v987 = vpack.c.b16 %v687, %v683
    %v988 = vpack.c.b16 %v688, %v684
    %v989 = vpack.c.b16 %v689, %v685
    %v990 = vpack.c.b16 %v690, %v686
    %v991 = vpack.c.b16 %v695, %v691
    %v992 = vpack.c.b16 %v696, %v692
    %v993 = vpack.c.b16 %v697, %v693
    %v994 = vpack.c.b16 %v698, %v694
    %v995 = vpack.c.b16 %v703, %v699
    %v996 = vpack.c.b16 %v704, %v700
    %v997 = vpack.c.b16 %v705, %v701
    %v998 = vpack.c.b16 %v706, %v702
    %v999 = vpack.c.b16 %v711, %v707
    %v1000 = vpack.c.b16 %v712, %v708
    %v1001 = vpack.c.b16 %v713, %v709
    %v1002 = vpack.c.b16 %v714, %v710
    %v1003 = vpack.c.b16 %v719, %v715
    %v1004 = vpack.c.b16 %v720, %v716
    %v1005 = vpack.c.b16 %v721, %v717
    %v1006 = vpack.c.b16 %v722, %v718
    %v1007 = vpack.c.b16 %v727, %v723
    %v1008 = vpack.c.b16 %v728, %v724
    %v1009 = vpack.c.b16 %v729, %v725
    %v1010 = vpack.c.b16 %v730, %v726
    %v1011 = vpack.c.b16 %v735, %v731
    %v1012 = vpack.c.b16 %v736, %v732
    %v1013 = vpack.c.b16 %v737, %v733
    %v1014 = vpack.c.b16 %v738, %v734
    %v1015 = vpack.c.b16 %v743, %v739
    %v1016 = vpack.c.b16 %v744, %v740
    %v1017 = vpack.c.b16 %v745, %v741
    %v1018 = vpack.c.b16 %v746, %v742
    %v1019 = vpack.c.b16 %v751, %v747
    %v1020 = vpack.c.b16 %v752, %v748
    %v1021 = vpack.c.b16 %v753, %v749
    %v1022 = vpack.c.b16 %v754, %v750
    %v1023 = vpack.c.b16 %v759, %v755
    %v1024 = vpack.c.b16 %v760, %v756
    %v1025 = vpack.c.b16 %v761, %v757
    %v1026 = vpack.c.b16 %v762, %v758
    %v1027 = vpack.c.b16 %v767, %v763
    %v1028 = vpack.c.b16 %v768, %v764
    %v1029 = vpack.c.b16 %v769, %v765
    %v1030 = vpack.c.b16 %v770, %v766
    %v1031 = vpack.c.b16 %v775, %v771
    %v1032 = vpack.c.b16 %v776, %v772
    %v1033 = vpack.c.b16 %v777, %v773
    %v1034 = vpack.c.b16 %v778, %v774
    %v1035 = vpack.c.b16 %v783, %v779
    %v1036 = vpack.c.b16 %v784, %v780
    %v1037 = vpack.c.b16 %v785, %v781
    %v1038 = vpack.c.b16 %v786, %v782
    %v1039 = vpack.c.b16 %v791, %v787
    %v1040 = vpack.c.b16 %v792, %v788
    %v1041 = vpack.c.b16 %v793, %v789
    %v1042 = vpack.c.b16 %v794, %v790
    %v1043 = vpack.c.b16 %v799, %v795
    %v1044 = vpack.c.b16 %v800, %v796
    %v1045 = vpack.c.b16 %v801, %v797
    %v1046 = vpack.c.b16 %v802, %v798
    %v1047 = vpack.c.b16 %v807, %v803
    %v1048 = vpack.c.b16 %v808, %v804
    %v1049 = vpack.c.b16 %v809, %v805
    %v1050 = vpack.c.b16 %v810, %v806
    %v1051 = vpack.c.b16 %v815, %v811
    %v1052 = vpack.c.b16 %v816, %v812
    %v1053 = vpack.c.b16 %v817, %v813
    %v1054 = vpack.c.b16 %v818, %v814
    %v1055 = vpack.c.b16 %v823, %v819
    %v1056 = vpack.c.b16 %v824, %v820
    %v1057 = vpack.c.b16 %v825, %v821
    %v1058 = vpack.c.b16 %v826, %v822
    %v1059 = vpack.c.b16 %v831, %v827
    %v1060 = vpack.c.b16 %v832, %v828
    %v1061 = vpack.c.b16 %v833, %v829
    %v1062 = vpack.c.b16 %v834, %v830
    %v1063 = vpack.c.b16 %v839, %v835
    %v1064 = vpack.c.b16 %v840, %v836
    %v1065 = vpack.c.b16 %v841, %v837
    %v1066 = vpack.c.b16 %v842, %v838
    %v1067 = vpack.c.b16 %v847, %v843
    %v1068 = vpack.c.b16 %v848, %v844
    %v1069 = vpack.c.b16 %v849, %v845
    %v1070 = vpack.c.b16 %v850, %v846
    %v1071 = vpack.c.b16 %v855, %v851
    %v1072 = vpack.c.b16 %v856, %v852
    %v1073 = vpack.c.b16 %v857, %v853
    %v1074 = vpack.c.b16 %v858, %v854
    %v1075 = vpack.c.b16 %v863, %v859
    %v1076 = vpack.c.b16 %v864, %v860
    %v1077 = vpack.c.b16 %v865, %v861
    %v1078 = vpack.c.b16 %v866, %v862
    %v1079 = vpack.c.b16 %v871, %v867
    %v1080 = vpack.c.b16 %v872, %v868
    %v1081 = vpack.c.b16 %v873, %v869
    %v1082 = vpack.c.b16 %v874, %v870
    %v1083 = vpack.c.b16 %v879, %v875
    %v1084 = vpack.c.b16 %v880, %v876
    %v1085 = vpack.c.b16 %v881, %v877
    %v1086 = vpack.c.b16 %v882, %v878
    %v1087 = vpack.c.b16 %v887, %v883
    %v1088 = vpack.c.b16 %v888, %v884
    %v1089 = vpack.c.b16 %v889, %v885
    %v1090 = vpack.c.b16 %v890, %v886
    %v1091 = vpack.c.b16 %v895, %v891
    %v1092 = vpack.c.b16 %v896, %v892
    %v1093 = vpack.c.b16 %v897, %v893
    %v1094 = vpack.c.b16 %v898, %v894
    %vm1291 = vcmask 130048
    %v1293 = vsel %vm1291, %v304, 0
    %1295 = vmatprep.subr.bf16.mxu0 %v900
    %1296 = vmatpush1.bf16.msra.mxu0 %v899
    %1297 = vmatprep.subr.bf16.mxu0 %v904
    %1298 = vmatpush1.bf16.msra.mxu0 %v903
    %1299 = vmatprep.subr.bf16.mxu0 %v908
    %1300 = vmatpush1.bf16.msra.mxu0 %v907
    %1301 = vmatprep.subr.bf16.mxu0 %v912
    %1302 = vmatpush1.bf16.msra.mxu0 %v911
    %1303 = vmatprep.subr.bf16.mxu0 %v916
    %1304 = vmatpush1.bf16.msra.mxu0 %v915
    %1305 = vmatprep.subr.bf16.mxu0 %v920
    %1306 = vmatpush1.bf16.msra.mxu0 %v919
    %1307 = vmatprep.subr.bf16.mxu0 %v924
    %1308 = vmatpush1.bf16.msra.mxu0 %v923
    %1309 = vmatprep.subr.bf16.mxu0 %v928
    %1310 = vmatpush1.bf16.msra.mxu0 %v927
    %1311 = vmatprep.subr.bf16.mxu0 %v932
    %1312 = vmatpush1.bf16.msra.mxu0 %v931
    %1313 = vmatprep.subr.bf16.mxu0 %v936
    %1314 = vmatpush1.bf16.msra.mxu0 %v935
    %1315 = vmatprep.subr.bf16.mxu0 %v940
    %1316 = vmatpush1.bf16.msra.mxu0 %v939
    %1317 = vmatprep.subr.bf16.mxu0 %v944
    %1318 = vmatpush1.bf16.msra.mxu0 %v943
    %1319 = vmatprep.subr.bf16.mxu0 %v948
    %1320 = vmatpush1.bf16.msra.mxu0 %v947
    %1321 = vmatprep.subr.bf16.mxu0 %v952
    %1322 = vmatpush1.bf16.msra.mxu0 %v951
    %1323 = vmatprep.subr.bf16.mxu0 %v956
    %1324 = vmatpush1.bf16.msra.mxu0 %v955
    %1325 = vmatprep.subr.bf16.mxu0 %v960
    %1326 = vmatpush1.bf16.msra.mxu0 %v959
    %1327 = vmatprep.mubr.bf16.mxu0 %v299
    %1328 = vmatmul.mubr.bf16.gmra.mrb[0].mxu0 %v298
    %v1329 = vpop.f32.mrb[0].mxu0
    %v1330 = vadd.f32 0.0, %v1329
    %v1331 = vpop.f32.mrb[0].mxu0
    %v1332 = vadd.f32 0.0, %v1331
    %v1333 = vpop.f32.mrb[0].mxu0
    %v1334 = vpop.f32.mrb[0].mxu0
    %1335 = vdwg.mxu0
    %1336 = vmatprep.subr.bf16.mxu0 %v964
    %1337 = vmatpush1.bf16.msra.mxu0 %v963
    %1338 = vmatprep.subr.bf16.mxu0 %v968
    %1339 = vmatpush1.bf16.msra.mxu0 %v967
    %1340 = vmatprep.subr.bf16.mxu0 %v972
    %1341 = vmatpush1.bf16.msra.mxu0 %v971
    %1342 = vmatprep.subr.bf16.mxu0 %v976
    %1343 = vmatpush1.bf16.msra.mxu0 %v975
    %1344 = vmatprep.subr.bf16.mxu0 %v980
    %1345 = vmatpush1.bf16.msra.mxu0 %v979
    %1346 = vmatprep.subr.bf16.mxu0 %v984
    %1347 = vmatpush1.bf16.msra.mxu0 %v983
    %1348 = vmatprep.subr.bf16.mxu0 %v988
    %1349 = vmatpush1.bf16.msra.mxu0 %v987
    %1350 = vmatprep.subr.bf16.mxu0 %v992
    %1351 = vmatpush1.bf16.msra.mxu0 %v991
    %1352 = vmatprep.subr.bf16.mxu0 %v996
    %1353 = vmatpush1.bf16.msra.mxu0 %v995
    %1354 = vmatprep.subr.bf16.mxu0 %v1000
    %1355 = vmatpush1.bf16.msra.mxu0 %v999
    %1356 = vmatprep.subr.bf16.mxu0 %v1004
    %1357 = vmatpush1.bf16.msra.mxu0 %v1003
    %1358 = vmatprep.subr.bf16.mxu0 %v1008
    %1359 = vmatpush1.bf16.msra.mxu0 %v1007
    %1360 = vmatprep.subr.bf16.mxu0 %v1012
    %1361 = vmatpush1.bf16.msra.mxu0 %v1011
    %1362 = vmatprep.subr.bf16.mxu0 %v1016
    %1363 = vmatpush1.bf16.msra.mxu0 %v1015
    %1364 = vmatprep.subr.bf16.mxu0 %v1020
    %1365 = vmatpush1.bf16.msra.mxu0 %v1019
    %1366 = vmatprep.subr.bf16.mxu0 %v1024
    %1367 = vmatpush1.bf16.msra.mxu0 %v1023
    %1368 = vmatprep.mubr.bf16.mxu0 %v301
    %1369 = vmatmul.mubr.bf16.gmra.mrb[0].mxu0 %v300
    %v1370 = vpop.f32.mrb[0].mxu0
    %v1371 = vadd.f32 %v1330, %v1370
    %v1372 = vpop.f32.mrb[0].mxu0
    %v1373 = vadd.f32 %v1332, %v1372
    %v1374 = vpop.f32.mrb[0].mxu0
    %v1375 = vpop.f32.mrb[0].mxu0
    %1376 = vdwg.mxu0
    %1377 = vmatprep.subr.bf16.mxu0 %v1028
    %1378 = vmatpush1.bf16.msra.mxu0 %v1027
    %1379 = vmatprep.subr.bf16.mxu0 %v1032
    %1380 = vmatpush1.bf16.msra.mxu0 %v1031
    %1381 = vmatprep.subr.bf16.mxu0 %v1036
    %1382 = vmatpush1.bf16.msra.mxu0 %v1035
    %1383 = vmatprep.subr.bf16.mxu0 %v1040
    %1384 = vmatpush1.bf16.msra.mxu0 %v1039
    %1385 = vmatprep.subr.bf16.mxu0 %v1044
    %1386 = vmatpush1.bf16.msra.mxu0 %v1043
    %1387 = vmatprep.subr.bf16.mxu0 %v1048
    %1388 = vmatpush1.bf16.msra.mxu0 %v1047
    %1389 = vmatprep.subr.bf16.mxu0 %v1052
    %1390 = vmatpush1.bf16.msra.mxu0 %v1051
    %1391 = vmatprep.subr.bf16.mxu0 %v1056
    %1392 = vmatpush1.bf16.msra.mxu0 %v1055
    %1393 = vmatprep.subr.bf16.mxu0 %v1060
    %1394 = vmatpush1.bf16.msra.mxu0 %v1059
    %1395 = vmatprep.subr.bf16.mxu0 %v1064
    %1396 = vmatpush1.bf16.msra.mxu0 %v1063
    %1397 = vmatprep.subr.bf16.mxu0 %v1068
    %1398 = vmatpush1.bf16.msra.mxu0 %v1067
    %1399 = vmatprep.subr.bf16.mxu0 %v1072
    %1400 = vmatpush1.bf16.msra.mxu0 %v1071
    %1401 = vmatprep.subr.bf16.mxu0 %v1076
    %1402 = vmatpush1.bf16.msra.mxu0 %v1075
    %1403 = vmatprep.subr.bf16.mxu0 %v1080
    %1404 = vmatpush1.bf16.msra.mxu0 %v1079
    %1405 = vmatprep.subr.bf16.mxu0 %v1084
    %1406 = vmatpush1.bf16.msra.mxu0 %v1083
    %1407 = vmatprep.subr.bf16.mxu0 %v1088
    %1408 = vmatpush1.bf16.msra.mxu0 %v1087
    %1409 = vmatprep.mubr.bf16.mxu0 %v303
    %1410 = vmatmul.mubr.bf16.gmra.mrb[0].mxu0 %v302
    %v1411 = vpop.f32.mrb[0].mxu0
    %v1412 = vadd.f32 %v1371, %v1411
    %v1413 = vpop.f32.mrb[0].mxu0
    %v1414 = vadd.f32 %v1373, %v1413
    %v1415 = vpop.f32.mrb[0].mxu0
    %v1416 = vpop.f32.mrb[0].mxu0
    %1417 = vdwg.mxu0
    %1418 = vmatprep.subr.bf16.mxu0 %v1092
    %1419 = vmatpush1.bf16.msra.mxu0 %v1091
    %1420 = vmatprep.subr.bf16.mxu0 0
    %1421 = vmatpush1.bf16.msra.mxu0 0
    %1422 = vmatprep.subr.bf16.mxu0 0
    %1423 = vmatpush1.bf16.msra.mxu0 0
    %1424 = vmatprep.subr.bf16.mxu0 0
    %1425 = vmatpush1.bf16.msra.mxu0 0
    %1426 = vmatprep.subr.bf16.mxu0 0
    %1427 = vmatpush1.bf16.msra.mxu0 0
    %1428 = vmatprep.subr.bf16.mxu0 0
    %1429 = vmatpush1.bf16.msra.mxu0 0
    %1430 = vmatprep.subr.bf16.mxu0 0
    %1431 = vmatpush1.bf16.msra.mxu0 0
    %1432 = vmatprep.subr.bf16.mxu0 0
    %1433 = vmatpush1.bf16.msra.mxu0 0
    %1434 = vmatprep.subr.bf16.mxu0 0
    %1435 = vmatpush1.bf16.msra.mxu0 0
    %1436 = vmatprep.subr.bf16.mxu0 0
    %1437 = vmatpush1.bf16.msra.mxu0 0
    %1438 = vmatprep.subr.bf16.mxu0 0
    %1439 = vmatpush1.bf16.msra.mxu0 0
    %1440 = vmatprep.subr.bf16.mxu0 0
    %1441 = vmatpush1.bf16.msra.mxu0 0
    %1442 = vmatprep.subr.bf16.mxu0 0
    %1443 = vmatpush1.bf16.msra.mxu0 0
    %1444 = vmatprep.subr.bf16.mxu0 0
    %1445 = vmatpush1.bf16.msra.mxu0 0
    %1446 = vmatprep.subr.bf16.mxu0 0
    %1447 = vmatpush1.bf16.msra.mxu0 0
    %1448 = vmatprep.subr.bf16.mxu0 0
    %1449 = vmatpush1.bf16.msra.mxu0 0
    %1450 = vmatprep.mubr.bf16.mxu0 0
    %1451 = vmatmul.mubr.bf16.gmra.mrb[0].mxu0 %v1293
    %v1452 = vpop.f32.mrb[0].mxu0
    %v1453 = vadd.f32 %v1412, %v1452
    %v1454 = vpop.f32.mrb[0].mxu0
    %v1455 = vadd.f32 %v1414, %v1454
    %v1456 = vpop.f32.mrb[0].mxu0
    %v1457 = vpop.f32.mrb[0].mxu0
    %1458 = vdwg.mxu0
    %1459 = vmatprep.subr.bf16.mxu0 %v902
    %1460 = vmatpush1.bf16.msra.mxu0 %v901
    %1461 = vmatprep.subr.bf16.mxu0 %v906
    %1462 = vmatpush1.bf16.msra.mxu0 %v905
    %1463 = vmatprep.subr.bf16.mxu0 %v910
    %1464 = vmatpush1.bf16.msra.mxu0 %v909
    %1465 = vmatprep.subr.bf16.mxu0 %v914
    %1466 = vmatpush1.bf16.msra.mxu0 %v913
    %1467 = vmatprep.subr.bf16.mxu0 %v918
    %1468 = vmatpush1.bf16.msra.mxu0 %v917
    %1469 = vmatprep.subr.bf16.mxu0 %v922
    %1470 = vmatpush1.bf16.msra.mxu0 %v921
    %1471 = vmatprep.subr.bf16.mxu0 %v926
    %1472 = vmatpush1.bf16.msra.mxu0 %v925
    %1473 = vmatprep.subr.bf16.mxu0 %v930
    %1474 = vmatpush1.bf16.msra.mxu0 %v929
    %1475 = vmatprep.subr.bf16.mxu0 %v934
    %1476 = vmatpush1.bf16.msra.mxu0 %v933
    %1477 = vmatprep.subr.bf16.mxu0 %v938
    %1478 = vmatpush1.bf16.msra.mxu0 %v937
    %1479 = vmatprep.subr.bf16.mxu0 %v942
    %1480 = vmatpush1.bf16.msra.mxu0 %v941
    %1481 = vmatprep.subr.bf16.mxu0 %v946
    %1482 = vmatpush1.bf16.msra.mxu0 %v945
    %1483 = vmatprep.subr.bf16.mxu0 %v950
    %1484 = vmatpush1.bf16.msra.mxu0 %v949
    %1485 = vmatprep.subr.bf16.mxu0 %v954
    %1486 = vmatpush1.bf16.msra.mxu0 %v953
    %1487 = vmatprep.subr.bf16.mxu0 %v958
    %1488 = vmatpush1.bf16.msra.mxu0 %v957
    %1489 = vmatprep.subr.bf16.mxu0 %v962
    %1490 = vmatpush1.bf16.msra.mxu0 %v961
    %1491 = vmatprep.mubr.bf16.mxu0 %v299
    %1492 = vmatmul.mubr.bf16.gmra.mrb[0].mxu0 %v298
    %v1493 = vpop.f32.mrb[0].mxu0
    %v1494 = vadd.f32 0.0, %v1493
    %v1495 = vpop.f32.mrb[0].mxu0
    %v1496 = vadd.f32 0.0, %v1495
    %v1497 = vpop.f32.mrb[0].mxu0
    %v1498 = vpop.f32.mrb[0].mxu0
    %1499 = vdwg.mxu0
    %1500 = vmatprep.subr.bf16.mxu0 %v966
    %1501 = vmatpush1.bf16.msra.mxu0 %v965
    %1502 = vmatprep.subr.bf16.mxu0 %v970
    %1503 = vmatpush1.bf16.msra.mxu0 %v969
    %1504 = vmatprep.subr.bf16.mxu0 %v974
    %1505 = vmatpush1.bf16.msra.mxu0 %v973
    %1506 = vmatprep.subr.bf16.mxu0 %v978
    %1507 = vmatpush1.bf16.msra.mxu0 %v977
    %1508 = vmatprep.subr.bf16.mxu0 %v982
    %1509 = vmatpush1.bf16.msra.mxu0 %v981
    %1510 = vmatprep.subr.bf16.mxu0 %v986
    %1511 = vmatpush1.bf16.msra.mxu0 %v985
    %1512 = vmatprep.subr.bf16.mxu0 %v990
    %1513 = vmatpush1.bf16.msra.mxu0 %v989
    %1514 = vmatprep.subr.bf16.mxu0 %v994
    %1515 = vmatpush1.bf16.msra.mxu0 %v993
    %1516 = vmatprep.subr.bf16.mxu0 %v998
    %1517 = vmatpush1.bf16.msra.mxu0 %v997
    %1518 = vmatprep.subr.bf16.mxu0 %v1002
    %1519 = vmatpush1.bf16.msra.mxu0 %v1001
    %1520 = vmatprep.subr.bf16.mxu0 %v1006
    %1521 = vmatpush1.bf16.msra.mxu0 %v1005
    %1522 = vmatprep.subr.bf16.mxu0 %v1010
    %1523 = vmatpush1.bf16.msra.mxu0 %v1009
    %1524 = vmatprep.subr.bf16.mxu0 %v1014
    %1525 = vmatpush1.bf16.msra.mxu0 %v1013
    %1526 = vmatprep.subr.bf16.mxu0 %v1018
    %1527 = vmatpush1.bf16.msra.mxu0 %v1017
    %1528 = vmatprep.subr.bf16.mxu0 %v1022
    %1529 = vmatpush1.bf16.msra.mxu0 %v1021
    %1530 = vmatprep.subr.bf16.mxu0 %v1026
    %1531 = vmatpush1.bf16.msra.mxu0 %v1025
    %1532 = vmatprep.mubr.bf16.mxu0 %v301
    %1533 = vmatmul.mubr.bf16.gmra.mrb[0].mxu0 %v300
    %v1534 = vpop.f32.mrb[0].mxu0
    %v1535 = vadd.f32 %v1494, %v1534
    %v1536 = vpop.f32.mrb[0].mxu0
    %v1537 = vadd.f32 %v1496, %v1536
    %v1538 = vpop.f32.mrb[0].mxu0
    %v1539 = vpop.f32.mrb[0].mxu0
    %1540 = vdwg.mxu0
    %1541 = vmatprep.subr.bf16.mxu0 %v1030
    %1542 = vmatpush1.bf16.msra.mxu0 %v1029
    %1543 = vmatprep.subr.bf16.mxu0 %v1034
    %1544 = vmatpush1.bf16.msra.mxu0 %v1033
    %1545 = vmatprep.subr.bf16.mxu0 %v1038
    %1546 = vmatpush1.bf16.msra.mxu0 %v1037
    %1547 = vmatprep.subr.bf16.mxu0 %v1042
    %1548 = vmatpush1.bf16.msra.mxu0 %v1041
    %1549 = vmatprep.subr.bf16.mxu0 %v1046
    %1550 = vmatpush1.bf16.msra.mxu0 %v1045
    %1551 = vmatprep.subr.bf16.mxu0 %v1050
    %1552 = vmatpush1.bf16.msra.mxu0 %v1049
    %1553 = vmatprep.subr.bf16.mxu0 %v1054
    %1554 = vmatpush1.bf16.msra.mxu0 %v1053
    %1555 = vmatprep.subr.bf16.mxu0 %v1058
    %1556 = vmatpush1.bf16.msra.mxu0 %v1057
    %1557 = vmatprep.subr.bf16.mxu0 %v1062
    %1558 = vmatpush1.bf16.msra.mxu0 %v1061
    %1559 = vmatprep.subr.bf16.mxu0 %v1066
    %1560 = vmatpush1.bf16.msra.mxu0 %v1065
    %1561 = vmatprep.subr.bf16.mxu0 %v1070
    %1562 = vmatpush1.bf16.msra.mxu0 %v1069
    %1563 = vmatprep.subr.bf16.mxu0 %v1074
    %1564 = vmatpush1.bf16.msra.mxu0 %v1073
    %1565 = vmatprep.subr.bf16.mxu0 %v1078
    %1566 = vmatpush1.bf16.msra.mxu0 %v1077
    %1567 = vmatprep.subr.bf16.mxu0 %v1082
    %1568 = vmatpush1.bf16.msra.mxu0 %v1081
    %1569 = vmatprep.subr.bf16.mxu0 %v1086
    %1570 = vmatpush1.bf16.msra.mxu0 %v1085
    %1571 = vmatprep.subr.bf16.mxu0 %v1090
    %1572 = vmatpush1.bf16.msra.mxu0 %v1089
    %1573 = vmatprep.mubr.bf16.mxu0 %v303
    %1574 = vmatmul.mubr.bf16.gmra.mrb[0].mxu0 %v302
    %v1575 = vpop.f32.mrb[0].mxu0
    %v1576 = vadd.f32 %v1535, %v1575
    %v1577 = vpop.f32.mrb[0].mxu0
    %v1578 = vadd.f32 %v1537, %v1577
    %v1579 = vpop.f32.mrb[0].mxu0
    %v1580 = vpop.f32.mrb[0].mxu0
    %1581 = vdwg.mxu0
    %1582 = vmatprep.subr.bf16.mxu0 %v1094
    %1583 = vmatpush1.bf16.msra.mxu0 %v1093
    %1584 = vmatprep.subr.bf16.mxu0 0
    %1585 = vmatpush1.bf16.msra.mxu0 0
    %1586 = vmatprep.subr.bf16.mxu0 0
    %1587 = vmatpush1.bf16.msra.mxu0 0
    %1588 = vmatprep.subr.bf16.mxu0 0
    %1589 = vmatpush1.bf16.msra.mxu0 0
    %1590 = vmatprep.subr.bf16.mxu0 0
    %1591 = vmatpush1.bf16.msra.mxu0 0
    %1592 = vmatprep.subr.bf16.mxu0 0
    %1593 = vmatpush1.bf16.msra.mxu0 0
    %1594 = vmatprep.subr.bf16.mxu0 0
    %1595 = vmatpush1.bf16.msra.mxu0 0
    %1596 = vmatprep.subr.bf16.mxu0 0
    %1597 = vmatpush1.bf16.msra.mxu0 0
    %1598 = vmatprep.subr.bf16.mxu0 0
    %1599 = vmatpush1.bf16.msra.mxu0 0
    %1600 = vmatprep.subr.bf16.mxu0 0
    %1601 = vmatpush1.bf16.msra.mxu0 0
    %1602 = vmatprep.subr.bf16.mxu0 0
    %1603 = vmatpush1.bf16.msra.mxu0 0
    %1604 = vmatprep.subr.bf16.mxu0 0
    %1605 = vmatpush1.bf16.msra.mxu0 0
    %1606 = vmatprep.subr.bf16.mxu0 0
    %1607 = vmatpush1.bf16.msra.mxu0 0
    %1608 = vmatprep.subr.bf16.mxu0 0
    %1609 = vmatpush1.bf16.msra.mxu0 0
    %1610 = vmatprep.subr.bf16.mxu0 0
    %1611 = vmatpush1.bf16.msra.mxu0 0
    %1612 = vmatprep.subr.bf16.mxu0 0
    %1613 = vmatpush1.bf16.msra.mxu0 0
    %1614 = vmatprep.mubr.bf16.mxu0 0
    %1615 = vmatmul.mubr.bf16.gmra.mrb[0].mxu0 %v1293
    %v1616 = vpop.f32.mrb[0].mxu0
    %v1617 = vadd.f32 %v1576, %v1616
    %v1618 = vpop.f32.mrb[0].mxu0
    %v1619 = vadd.f32 %v1578, %v1618
    %v1620 = vpop.f32.mrb[0].mxu0
    %v1621 = vpop.f32.mrb[0].mxu0
    %1622 = vdwg.mxu0
    %v1623 = vld [vmem:[%s2] sm:$0xf]
    %v1624 = vld [vmem:[%s3] sm:$0xf]
    %v1625 = vrot.slane %v1453, 4
    %v1626 = vadd.f32 %v1453, %v1625
    %v1627 = vrot.slane %v1626, 2
    %v1628 = vadd.f32 %v1626, %v1627
    %v1629 = vrot.slane %v1628, 1
    %v1630 = vadd.f32 %v1628, %v1629
    %v1631 = vrot.slane %v1455, 4
    %v1632 = vadd.f32 %v1455, %v1631
    %v1633 = vrot.slane %v1632, 2
    %v1634 = vadd.f32 %v1632, %v1633
    %v1635 = vrot.slane %v1634, 1
    %v1636 = vadd.f32 %v1634, %v1635
    %v1637 = vrot.slane %v1617, 4
    %v1638 = vadd.f32 %v1617, %v1637
    %v1639 = vrot.slane %v1638, 2
    %v1640 = vadd.f32 %v1638, %v1639
    %v1641 = vrot.slane %v1640, 1
    %v1642 = vadd.f32 %v1640, %v1641
    %v1643 = vrot.slane %v1619, 4
    %v1644 = vadd.f32 %v1619, %v1643
    %v1645 = vrot.slane %v1644, 2
    %v1646 = vadd.f32 %v1644, %v1645
    %v1647 = vrot.slane %v1646, 1
    %v1648 = vadd.f32 %v1646, %v1647
    %v1649 = vmul.f32 %v1630, 0.125
    %v1650 = vmul.f32 %v1636, 0.125
    %v1651 = vmul.f32 %v1642, 0.125
    %v1652 = vmul.f32 %v1648, 0.125
    %v1653 = vmul.f32 %v1453, %v1453
    %v1654 = vmul.f32 %v1455, %v1455
    %v1655 = vmul.f32 %v1617, %v1617
    %v1656 = vmul.f32 %v1619, %v1619
    %v1657 = vrot.slane %v1653, 4
    %v1658 = vadd.f32 %v1653, %v1657
    %v1659 = vrot.slane %v1658, 2
    %v1660 = vadd.f32 %v1658, %v1659
    %v1661 = vrot.slane %v1660, 1
    %v1662 = vadd.f32 %v1660, %v1661
    %v1663 = vrot.slane %v1654, 4
    %v1664 = vadd.f32 %v1654, %v1663
    %v1665 = vrot.slane %v1664, 2
    %v1666 = vadd.f32 %v1664, %v1665
    %v1667 = vrot.slane %v1666, 1
    %v1668 = vadd.f32 %v1666, %v1667
    %v1669 = vrot.slane %v1655, 4
    %v1670 = vadd.f32 %v1655, %v1669
    %v1671 = vrot.slane %v1670, 2
    %v1672 = vadd.f32 %v1670, %v1671
    %v1673 = vrot.slane %v1672, 1
    %v1674 = vadd.f32 %v1672, %v1673
    %v1675 = vrot.slane %v1656, 4
    %v1676 = vadd.f32 %v1656, %v1675
    %v1677 = vrot.slane %v1676, 2
    %v1678 = vadd.f32 %v1676, %v1677
    %v1679 = vrot.slane %v1678, 1
    %v1680 = vadd.f32 %v1678, %v1679
    %v1681 = vmul.f32 %v1662, 0.125
    %v1682 = vmul.f32 %v1668, 0.125
    %v1683 = vmul.f32 %v1674, 0.125
    %v1684 = vmul.f32 %v1680, 0.125
    %v1685 = vmul.f32 %v1649, %v1649
    %v1686 = vmul.f32 %v1650, %v1650
    %v1687 = vmul.f32 %v1651, %v1651
    %v1688 = vmul.f32 %v1652, %v1652
    %v1689 = vsub.f32 %v1681, %v1685
    %v1690 = vsub.f32 %v1682, %v1686
    %v1691 = vsub.f32 %v1683, %v1687
    %v1692 = vsub.f32 %v1684, %v1688
    %v1693 = vmax.f32 %v1689, 0.0
    %v1694 = vmax.f32 %v1690, 0.0
    %v1695 = vmax.f32 %v1691, 0.0
    %v1696 = vmax.f32 %v1692, 0.0
    %v1697 = vadd.f32 %v1693, 1e-05
    %v1698 = vadd.f32 %v1694, 1e-05
    %v1699 = vadd.f32 %v1695, 1e-05
    %v1700 = vadd.f32 %v1696, 1e-05
    %v1701 = vrsqrt.pop %v1697
    %v1702 = vrsqrt.pop %v1698
    %v1703 = vrsqrt.pop %v1699
    %v1704 = vrsqrt.pop %v1700
    %v1709 = vcombine.low %v1701, %v1702
    %v1710 = vcombine.low %v1703, %v1704
    %v1712 = vunpack.c.l.s4 1966171168
    %v1713 = vunpack.c.0.s8 %v1712
    %v1714 = vlaneseq
    %v1715 = vshrl.u32 %v1714, 7
    %v1716 = vsub.s32 %v1713, %v1715
    %v1717 = vrot.slane %v1709, %v1716
    %v1719 = vunpack.c.l.s4 1966171168
    %v1720 = vunpack.c.0.s8 %v1719
    %v1721 = vlaneseq
    %v1722 = vshrl.u32 %v1721, 7
    %v1723 = vsub.s32 %v1720, %v1722
    %v1724 = vrot.slane %v1710, %v1723
    %v1725 = vcombine.low %v1717, %v1724
    %v1727 = vunpack.c.l.s4 1966171168
    %v1728 = vunpack.c.0.s8 %v1727
    %v1729 = vlaneseq
    %v1730 = vshrl.u32 %v1729, 7
    %v1731 = vsub.s32 %v1728, %v1730
    %v1732 = vrot.slane %v1725, %v1731
    %v1734 = vmul.f32 %v1623, %v1732
    %v1736 = vlaneseq
    %v1737 = vshrl.u32 %v1736, 7
    %v1738 = vsub.s32 0, %v1737
    %v1739 = vrot.slane %v1734, %v1738
    %v1740 = vlaneseq
    %v1741 = vshrl.u32 %v1740, 7
    %v1742 = vsub.s32 1, %v1741
    %v1743 = vrot.slane %v1734, %v1742
    %v1744 = vlaneseq
    %v1745 = vshrl.u32 %v1744, 7
    %v1746 = vsub.s32 2, %v1745
    %v1747 = vrot.slane %v1734, %v1746
    %v1748 = vlaneseq
    %v1749 = vshrl.u32 %v1748, 7
    %v1750 = vsub.s32 3, %v1749
    %v1751 = vrot.slane %v1734, %v1750
    %v1756 = vmul.f32 %v1649, %v1739
    %v1757 = vmul.f32 %v1650, %v1743
    %v1758 = vmul.f32 %v1651, %v1747
    %v1759 = vmul.f32 %v1652, %v1751
    %v1764 = vcombine.low %v1756, %v1757
    %v1765 = vcombine.low %v1758, %v1759
    %v1767 = vunpack.c.l.s4 1966171168
    %v1768 = vunpack.c.0.s8 %v1767
    %v1769 = vlaneseq
    %v1770 = vshrl.u32 %v1769, 7
    %v1771 = vsub.s32 %v1768, %v1770
    %v1772 = vrot.slane %v1764, %v1771
    %v1774 = vunpack.c.l.s4 1966171168
    %v1775 = vunpack.c.0.s8 %v1774
    %v1776 = vlaneseq
    %v1777 = vshrl.u32 %v1776, 7
    %v1778 = vsub.s32 %v1775, %v1777
    %v1779 = vrot.slane %v1765, %v1778
    %v1780 = vcombine.low %v1772, %v1779
    %v1782 = vunpack.c.l.s4 1966171168
    %v1783 = vunpack.c.0.s8 %v1782
    %v1784 = vlaneseq
    %v1785 = vshrl.u32 %v1784, 7
    %v1786 = vsub.s32 %v1783, %v1785
    %v1787 = vrot.slane %v1780, %v1786
    %v1789 = vsub.f32 %v1624, %v1787
    %v1790 = vmul.f32 %v1453, %v1739
    %v1791 = vmul.f32 %v1455, %v1743
    %v1792 = vmul.f32 %v1617, %v1747
    %v1793 = vmul.f32 %v1619, %v1751
    %v1795 = vlaneseq
    %v1796 = vshrl.u32 %v1795, 7
    %v1797 = vsub.s32 0, %v1796
    %v1798 = vrot.slane %v1789, %v1797
    %v1799 = vlaneseq
    %v1800 = vshrl.u32 %v1799, 7
    %v1801 = vsub.s32 1, %v1800
    %v1802 = vrot.slane %v1789, %v1801
    %v1803 = vlaneseq
    %v1804 = vshrl.u32 %v1803, 7
    %v1805 = vsub.s32 2, %v1804
    %v1806 = vrot.slane %v1789, %v1805
    %v1807 = vlaneseq
    %v1808 = vshrl.u32 %v1807, 7
    %v1809 = vsub.s32 3, %v1808
    %v1810 = vrot.slane %v1789, %v1809
    %v1815 = vadd.f32 %v1790, %v1798
    %v1816 = vadd.f32 %v1791, %v1802
    %v1817 = vadd.f32 %v1792, %v1806
    %v1818 = vadd.f32 %v1793, %v1810
    %v1819 = vmax.f32 %v1815, 0.0
    %v1820 = vmax.f32 %v1816, 0.0
    %v1821 = vmax.f32 %v1817, 0.0
    %v1822 = vmax.f32 %v1818, 0.0
    %v1823 = vpack.c.bf16 %v1819, %v1819
    %v1824 = vpack.c.bf16 %v1820, %v1820
    %v1825 = vpack.c.bf16 %v1821, %v1821
    %v1826 = vpack.c.bf16 %v1822, %v1822
    %v1827 = vld [vmem:[#allocation7] sm:$0xff]
    %v1828 = vld [vmem:[#allocation7 + $0x8] sm:$0xff]
    %v1829 = vld [vmem:[#allocation7 + $0x10] sm:$0xff]
    %v1830 = vld [vmem:[#allocation7 + $0x18] sm:$0xff]
    %v1831 = vld [vmem:[#allocation7 + $0x20] sm:$0xff]
    %v1832 = vld [vmem:[#allocation7 + $0x28] sm:$0xff]
    %v1833 = vld [vmem:[#allocation7 + $0x30] sm:$0xff]
    %v1834 = vld [vmem:[#allocation7 + $0x38] sm:$0xff]
    %v1835 = vld [vmem:[#allocation7 + $0x40] sm:$0xff]
    %v1836 = vld [vmem:[#allocation7 + $0x48] sm:$0xff]
    %v1837 = vld [vmem:[#allocation7 + $0x50] sm:$0xff]
    %v1838 = vld [vmem:[#allocation7 + $0x58] sm:$0xff]
    %v1839 = vld [vmem:[#allocation7 + $0x60] sm:$0xff]
    %v1840 = vld [vmem:[#allocation7 + $0x68] sm:$0xff]
    %v1841 = vld [vmem:[#allocation7 + $0x70] sm:$0xff]
    %v1842 = vld [vmem:[#allocation7 + $0x78] sm:$0xff]
    %v1843 = vld [vmem:[#allocation7 + $0x80] sm:$0xff]
    %v1844 = vld [vmem:[#allocation7 + $0x88] sm:$0xff]
    %v1845 = vld [vmem:[#allocation7 + $0x90] sm:$0xff]
    %v1846 = vld [vmem:[#allocation7 + $0x98] sm:$0xff]
    %v1847 = vld [vmem:[#allocation7 + $0xa0] sm:$0xff]
    %v1848 = vld [vmem:[#allocation7 + $0xa8] sm:$0xff]
    %v1849 = vld [vmem:[#allocation7 + $0xb0] sm:$0xff]
    %v1850 = vld [vmem:[#allocation7 + $0xb8] sm:$0xff]
    %v1851 = vld [vmem:[#allocation7 + $0xc0] sm:$0xff]
    %v1852 = vld [vmem:[#allocation7 + $0xc8] sm:$0xff]
    %v1853 = vld [vmem:[#allocation7 + $0xd0] sm:$0xff]
    %v1854 = vld [vmem:[#allocation7 + $0xd8] sm:$0xff]
    %v1855 = vld [vmem:[#allocation7 + $0xe0] sm:$0xff]
    %v1856 = vld [vmem:[#allocation7 + $0xe8] sm:$0xff]
    %v1857 = vld [vmem:[#allocation7 + $0xf0] sm:$0xff]
    %v1858 = vld [vmem:[#allocation7 + $0xf8] sm:$0xff]
    %v1859 = vld [vmem:[#allocation7 + $0x100] sm:$0xff]
    %v1860 = vld [vmem:[#allocation7 + $0x108] sm:$0xff]
    %v1861 = vld [vmem:[#allocation7 + $0x110] sm:$0xff]
    %v1862 = vld [vmem:[#allocation7 + $0x118] sm:$0xff]
    %v1863 = vld [vmem:[#allocation7 + $0x120] sm:$0xff]
    %v1864 = vld [vmem:[#allocation7 + $0x128] sm:$0xff]
    %v1865 = vld [vmem:[#allocation7 + $0x130] sm:$0xff]
    %v1866 = vld [vmem:[#allocation7 + $0x138] sm:$0xff]
    %v1867 = vld [vmem:[#allocation7 + $0x140] sm:$0xff]
    %v1868 = vld [vmem:[#allocation7 + $0x148] sm:$0xff]
    %v1869 = vld [vmem:[#allocation7 + $0x150] sm:$0xff]
    %v1870 = vld [vmem:[#allocation7 + $0x158] sm:$0xff]
    %v1871 = vld [vmem:[#allocation7 + $0x160] sm:$0xff]
    %v1872 = vld [vmem:[#allocation7 + $0x168] sm:$0xff]
    %v1873 = vld [vmem:[#allocation7 + $0x170] sm:$0xff]
    %v1874 = vld [vmem:[#allocation7 + $0x178] sm:$0xff]
    %v1875 = vld [vmem:[#allocation7 + $0x180] sm:$0xff]
    %v1876 = vld [vmem:[#allocation7 + $0x188] sm:$0xff]
    %v1877 = vld [vmem:[#allocation7 + $0x190] sm:$0xff]
    %v1878 = vld [vmem:[#allocation7 + $0x198] sm:$0xff]
    %v1879 = vld [vmem:[#allocation7 + $0x1a0] sm:$0xff]
    %v1880 = vld [vmem:[#allocation7 + $0x1a8] sm:$0xff]
    %v1881 = vld [vmem:[#allocation7 + $0x1b0] sm:$0xff]
    %v1882 = vld [vmem:[#allocation7 + $0x1b8] sm:$0xff]
    %v1883 = vld [vmem:[#allocation7 + $0x1c0] sm:$0xff]
    %v1884 = vld [vmem:[#allocation7 + $0x1c8] sm:$0xff]
    %v1885 = vld [vmem:[#allocation7 + $0x1d0] sm:$0xff]
    %v1886 = vld [vmem:[#allocation7 + $0x1d8] sm:$0xff]
    %v1887 = vld [vmem:[#allocation7 + $0x1e0] sm:$0xff]
    %v1888 = vld [vmem:[#allocation7 + $0x1e8] sm:$0xff]
    %v1889 = vld [vmem:[#allocation7 + $0x1f0] sm:$0xff]
    %v1890 = vld [vmem:[#allocation7 + $0x1f8] sm:$0xff]
    %v1891 = vld [vmem:[#allocation7 + $0x200] sm:$0xff]
    %v1892 = vld [vmem:[#allocation7 + $0x208] sm:$0xff]
    %v1893 = vld [vmem:[#allocation7 + $0x210] sm:$0xff]
    %v1894 = vld [vmem:[#allocation7 + $0x218] sm:$0xff]
    %v1895 = vld [vmem:[#allocation7 + $0x220] sm:$0xff]
    %v1896 = vld [vmem:[#allocation7 + $0x228] sm:$0xff]
    %v1897 = vld [vmem:[#allocation7 + $0x230] sm:$0xff]
    %v1898 = vld [vmem:[#allocation7 + $0x238] sm:$0xff]
    %v1899 = vld [vmem:[#allocation7 + $0x240] sm:$0xff]
    %v1900 = vld [vmem:[#allocation7 + $0x248] sm:$0xff]
    %v1901 = vld [vmem:[#allocation7 + $0x250] sm:$0xff]
    %v1902 = vld [vmem:[#allocation7 + $0x258] sm:$0xff]
    %v1903 = vld [vmem:[#allocation7 + $0x260] sm:$0xff]
    %v1904 = vld [vmem:[#allocation7 + $0x268] sm:$0xff]
    %v1905 = vld [vmem:[#allocation7 + $0x270] sm:$0xff]
    %v1906 = vld [vmem:[#allocation7 + $0x278] sm:$0xff]
    %v1907 = vld [vmem:[#allocation7 + $0x280] sm:$0xff]
    %v1908 = vld [vmem:[#allocation7 + $0x288] sm:$0xff]
    %v1909 = vld [vmem:[#allocation7 + $0x290] sm:$0xff]
    %v1910 = vld [vmem:[#allocation7 + $0x298] sm:$0xff]
    %v1911 = vld [vmem:[#allocation7 + $0x2a0] sm:$0xff]
    %v1912 = vld [vmem:[#allocation7 + $0x2a8] sm:$0xff]
    %v1913 = vld [vmem:[#allocation7 + $0x2b0] sm:$0xff]
    %v1914 = vld [vmem:[#allocation7 + $0x2b8] sm:$0xff]
    %v1915 = vld [vmem:[#allocation7 + $0x2c0] sm:$0xff]
    %v1916 = vld [vmem:[#allocation7 + $0x2c8] sm:$0xff]
    %v1917 = vld [vmem:[#allocation7 + $0x2d0] sm:$0xff]
    %v1918 = vld [vmem:[#allocation7 + $0x2d8] sm:$0xff]
    %v1919 = vld [vmem:[#allocation7 + $0x2e0] sm:$0xff]
    %v1920 = vld [vmem:[#allocation7 + $0x2e8] sm:$0xff]
    %v1921 = vld [vmem:[#allocation7 + $0x2f0] sm:$0xff]
    %v1922 = vld [vmem:[#allocation7 + $0x2f8] sm:$0xff]
    %v1923 = vld [vmem:[#allocation7 + $0x300] sm:$0xff]
    %v1924 = vld [vmem:[#allocation7 + $0x308] sm:$0xff]
    %v1925 = vld [vmem:[#allocation7 + $0x310] sm:$0xff]
    %v1926 = vld [vmem:[#allocation7 + $0x318] sm:$0xff]
    %v1927 = vld [vmem:[#allocation7 + $0x320] sm:$0xff]
    %v1928 = vld [vmem:[#allocation7 + $0x328] sm:$0xff]
    %v1929 = vld [vmem:[#allocation7 + $0x330] sm:$0xff]
    %v1930 = vld [vmem:[#allocation7 + $0x338] sm:$0xff]
    %v1931 = vld [vmem:[#allocation7 + $0x340] sm:$0xff]
    %v1932 = vld [vmem:[#allocation7 + $0x348] sm:$0xff]
    %v1933 = vld [vmem:[#allocation7 + $0x350] sm:$0xff]
    %v1934 = vld [vmem:[#allocation7 + $0x358] sm:$0xff]
    %v1935 = vld [vmem:[#allocation7 + $0x360] sm:$0xff]
    %v1936 = vld [vmem:[#allocation7 + $0x368] sm:$0xff]
    %v1937 = vld [vmem:[#allocation7 + $0x370] sm:$0xff]
    %v1938 = vld [vmem:[#allocation7 + $0x378] sm:$0xff]
    %v1939 = vld [vmem:[#allocation7 + $0x380] sm:$0xff]
    %v1940 = vld [vmem:[#allocation7 + $0x388] sm:$0xff]
    %v1941 = vld [vmem:[#allocation7 + $0x390] sm:$0xff]
    %v1942 = vld [vmem:[#allocation7 + $0x398] sm:$0xff]
    %v1943 = vld [vmem:[#allocation7 + $0x3a0] sm:$0xff]
    %v1944 = vld [vmem:[#allocation7 + $0x3a8] sm:$0xff]
    %v1945 = vld [vmem:[#allocation7 + $0x3b0] sm:$0xff]
    %v1946 = vld [vmem:[#allocation7 + $0x3b8] sm:$0xff]
    %v1947 = vld [vmem:[#allocation7 + $0x3c0] sm:$0xff]
    %v1948 = vld [vmem:[#allocation7 + $0x3c8] sm:$0xff]
    %v1949 = vld [vmem:[#allocation7 + $0x3d0] sm:$0xff]
    %v1950 = vld [vmem:[#allocation7 + $0x3d8] sm:$0xff]
    %v1951 = vld [vmem:[#allocation7 + $0x3e0] sm:$0xff]
    %v1952 = vld [vmem:[#allocation7 + $0x3e8] sm:$0xff]
    %v1953 = vld [vmem:[#allocation7 + $0x3f0] sm:$0xff]
    %v1954 = vld [vmem:[#allocation7 + $0x3f8] sm:$0xff]
    %v2083 = vunpack.c.l.b16 %v1827
    %v2084 = vunpack.c.h.b16 %v1827
    %v2085 = vunpack.c.l.b16 %v1828
    %v2086 = vunpack.c.h.b16 %v1828
    %v2087 = vunpack.c.l.b16 %v1829
    %v2088 = vunpack.c.h.b16 %v1829
    %v2089 = vunpack.c.l.b16 %v1830
    %v2090 = vunpack.c.h.b16 %v1830
    %v2091 = vunpack.c.l.b16 %v1831
    %v2092 = vunpack.c.h.b16 %v1831
    %v2093 = vunpack.c.l.b16 %v1832
    %v2094 = vunpack.c.h.b16 %v1832
    %v2095 = vunpack.c.l.b16 %v1833
    %v2096 = vunpack.c.h.b16 %v1833
    %v2097 = vunpack.c.l.b16 %v1834
    %v2098 = vunpack.c.h.b16 %v1834
    %v2099 = vunpack.c.l.b16 %v1835
    %v2100 = vunpack.c.h.b16 %v1835
    %v2101 = vunpack.c.l.b16 %v1836
    %v2102 = vunpack.c.h.b16 %v1836
    %v2103 = vunpack.c.l.b16 %v1837
    %v2104 = vunpack.c.h.b16 %v1837
    %v2105 = vunpack.c.l.b16 %v1838
    %v2106 = vunpack.c.h.b16 %v1838
    %v2107 = vunpack.c.l.b16 %v1839
    %v2108 = vunpack.c.h.b16 %v1839
    %v2109 = vunpack.c.l.b16 %v1840
    %v2110 = vunpack.c.h.b16 %v1840
    %v2111 = vunpack.c.l.b16 %v1841
    %v2112 = vunpack.c.h.b16 %v1841
    %v2113 = vunpack.c.l.b16 %v1842
    %v2114 = vunpack.c.h.b16 %v1842
    %v2115 = vunpack.c.l.b16 %v1843
    %v2116 = vunpack.c.h.b16 %v1843
    %v2117 = vunpack.c.l.b16 %v1844
    %v2118 = vunpack.c.h.b16 %v1844
    %v2119 = vunpack.c.l.b16 %v1845
    %v2120 = vunpack.c.h.b16 %v1845
    %v2121 = vunpack.c.l.b16 %v1846
    %v2122 = vunpack.c.h.b16 %v1846
    %v2123 = vunpack.c.l.b16 %v1847
    %v2124 = vunpack.c.h.b16 %v1847
    %v2125 = vunpack.c.l.b16 %v1848
    %v2126 = vunpack.c.h.b16 %v1848
    %v2127 = vunpack.c.l.b16 %v1849
    %v2128 = vunpack.c.h.b16 %v1849
    %v2129 = vunpack.c.l.b16 %v1850
    %v2130 = vunpack.c.h.b16 %v1850
    %v2131 = vunpack.c.l.b16 %v1851
    %v2132 = vunpack.c.h.b16 %v1851
    %v2133 = vunpack.c.l.b16 %v1852
    %v2134 = vunpack.c.h.b16 %v1852
    %v2135 = vunpack.c.l.b16 %v1853
    %v2136 = vunpack.c.h.b16 %v1853
    %v2137 = vunpack.c.l.b16 %v1854
    %v2138 = vunpack.c.h.b16 %v1854
    %v2139 = vunpack.c.l.b16 %v1855
    %v2140 = vunpack.c.h.b16 %v1855
    %v2141 = vunpack.c.l.b16 %v1856
    %v2142 = vunpack.c.h.b16 %v1856
    %v2143 = vunpack.c.l.b16 %v1857
    %v2144 = vunpack.c.h.b16 %v1857
    %v2145 = vunpack.c.l.b16 %v1858
    %v2146 = vunpack.c.h.b16 %v1858
    %v2147 = vunpack.c.l.b16 %v1859
    %v2148 = vunpack.c.h.b16 %v1859
    %v2149 = vunpack.c.l.b16 %v1860
    %v2150 = vunpack.c.h.b16 %v1860
    %v2151 = vunpack.c.l.b16 %v1861
    %v2152 = vunpack.c.h.b16 %v1861
    %v2153 = vunpack.c.l.b16 %v1862
    %v2154 = vunpack.c.h.b16 %v1862
    %v2155 = vunpack.c.l.b16 %v1863
    %v2156 = vunpack.c.h.b16 %v1863
    %v2157 = vunpack.c.l.b16 %v1864
    %v2158 = vunpack.c.h.b16 %v1864
    %v2159 = vunpack.c.l.b16 %v1865
    %v2160 = vunpack.c.h.b16 %v1865
    %v2161 = vunpack.c.l.b16 %v1866
    %v2162 = vunpack.c.h.b16 %v1866
    %v2163 = vunpack.c.l.b16 %v1867
    %v2164 = vunpack.c.h.b16 %v1867
    %v2165 = vunpack.c.l.b16 %v1868
    %v2166 = vunpack.c.h.b16 %v1868
    %v2167 = vunpack.c.l.b16 %v1869
    %v2168 = vunpack.c.h.b16 %v1869
    %v2169 = vunpack.c.l.b16 %v1870
    %v2170 = vunpack.c.h.b16 %v1870
    %v2171 = vunpack.c.l.b16 %v1871
    %v2172 = vunpack.c.h.b16 %v1871
    %v2173 = vunpack.c.l.b16 %v1872
    %v2174 = vunpack.c.h.b16 %v1872
    %v2175 = vunpack.c.l.b16 %v1873
    %v2176 = vunpack.c.h.b16 %v1873
    %v2177 = vunpack.c.l.b16 %v1874
    %v2178 = vunpack.c.h.b16 %v1874
    %v2179 = vunpack.c.l.b16 %v1875
    %v2180 = vunpack.c.h.b16 %v1875
    %v2181 = vunpack.c.l.b16 %v1876
    %v2182 = vunpack.c.h.b16 %v1876
    %v2183 = vunpack.c.l.b16 %v1877
    %v2184 = vunpack.c.h.b16 %v1877
    %v2185 = vunpack.c.l.b16 %v1878
    %v2186 = vunpack.c.h.b16 %v1878
    %v2187 = vunpack.c.l.b16 %v1879
    %v2188 = vunpack.c.h.b16 %v1879
    %v2189 = vunpack.c.l.b16 %v1880
    %v2190 = vunpack.c.h.b16 %v1880
    %v2191 = vunpack.c.l.b16 %v1881
    %v2192 = vunpack.c.h.b16 %v1881
    %v2193 = vunpack.c.l.b16 %v1882
    %v2194 = vunpack.c.h.b16 %v1882
    %v2195 = vunpack.c.l.b16 %v1883
    %v2196 = vunpack.c.h.b16 %v1883
    %v2197 = vunpack.c.l.b16 %v1884
    %v2198 = vunpack.c.h.b16 %v1884
    %v2199 = vunpack.c.l.b16 %v1885
    %v2200 = vunpack.c.h.b16 %v1885
    %v2201 = vunpack.c.l.b16 %v1886
    %v2202 = vunpack.c.h.b16 %v1886
    %v2203 = vunpack.c.l.b16 %v1887
    %v2204 = vunpack.c.h.b16 %v1887
    %v2205 = vunpack.c.l.b16 %v1888
    %v2206 = vunpack.c.h.b16 %v1888
    %v2207 = vunpack.c.l.b16 %v1889
    %v2208 = vunpack.c.h.b16 %v1889
    %v2209 = vunpack.c.l.b16 %v1890
    %v2210 = vunpack.c.h.b16 %v1890
    %v2211 = vunpack.c.l.b16 %v1891
    %v2212 = vunpack.c.h.b16 %v1891
    %v2213 = vunpack.c.l.b16 %v1892
    %v2214 = vunpack.c.h.b16 %v1892
    %v2215 = vunpack.c.l.b16 %v1893
    %v2216 = vunpack.c.h.b16 %v1893
    %v2217 = vunpack.c.l.b16 %v1894
    %v2218 = vunpack.c.h.b16 %v1894
    %v2219 = vunpack.c.l.b16 %v1895
    %v2220 = vunpack.c.h.b16 %v1895
    %v2221 = vunpack.c.l.b16 %v1896
    %v2222 = vunpack.c.h.b16 %v1896
    %v2223 = vunpack.c.l.b16 %v1897
    %v2224 = vunpack.c.h.b16 %v1897
    %v2225 = vunpack.c.l.b16 %v1898
    %v2226 = vunpack.c.h.b16 %v1898
    %v2227 = vunpack.c.l.b16 %v1899
    %v2228 = vunpack.c.h.b16 %v1899
    %v2229 = vunpack.c.l.b16 %v1900
    %v2230 = vunpack.c.h.b16 %v1900
    %v2231 = vunpack.c.l.b16 %v1901
    %v2232 = vunpack.c.h.b16 %v1901
    %v2233 = vunpack.c.l.b16 %v1902
    %v2234 = vunpack.c.h.b16 %v1902
    %v2235 = vunpack.c.l.b16 %v1903
    %v2236 = vunpack.c.h.b16 %v1903
    %v2237 = vunpack.c.l.b16 %v1904
    %v2238 = vunpack.c.h.b16 %v1904
    %v2239 = vunpack.c.l.b16 %v1905
    %v2240 = vunpack.c.h.b16 %v1905
    %v2241 = vunpack.c.l.b16 %v1906
    %v2242 = vunpack.c.h.b16 %v1906
    %v2243 = vunpack.c.l.b16 %v1907
    %v2244 = vunpack.c.h.b16 %v1907
    %v2245 = vunpack.c.l.b16 %v1908
    %v2246 = vunpack.c.h.b16 %v1908
    %v2247 = vunpack.c.l.b16 %v1909
    %v2248 = vunpack.c.h.b16 %v1909
    %v2249 = vunpack.c.l.b16 %v1910
    %v2250 = vunpack.c.h.b16 %v1910
    %v2251 = vunpack.c.l.b16 %v1911
    %v2252 = vunpack.c.h.b16 %v1911
    %v2253 = vunpack.c.l.b16 %v1912
    %v2254 = vunpack.c.h.b16 %v1912
    %v2255 = vunpack.c.l.b16 %v1913
    %v2256 = vunpack.c.h.b16 %v1913
    %v2257 = vunpack.c.l.b16 %v1914
    %v2258 = vunpack.c.h.b16 %v1914
    %v2259 = vunpack.c.l.b16 %v1915
    %v2260 = vunpack.c.h.b16 %v1915
    %v2261 = vunpack.c.l.b16 %v1916
    %v2262 = vunpack.c.h.b16 %v1916
    %v2263 = vunpack.c.l.b16 %v1917
    %v2264 = vunpack.c.h.b16 %v1917
    %v2265 = vunpack.c.l.b16 %v1918
    %v2266 = vunpack.c.h.b16 %v1918
    %v2267 = vunpack.c.l.b16 %v1919
    %v2268 = vunpack.c.h.b16 %v1919
    %v2269 = vunpack.c.l.b16 %v1920
    %v2270 = vunpack.c.h.b16 %v1920
    %v2271 = vunpack.c.l.b16 %v1921
    %v2272 = vunpack.c.h.b16 %v1921
    %v2273 = vunpack.c.l.b16 %v1922
    %v2274 = vunpack.c.h.b16 %v1922
    %v2275 = vunpack.c.l.b16 %v1923
    %v2276 = vunpack.c.h.b16 %v1923
    %v2277 = vunpack.c.l.b16 %v1924
    %v2278 = vunpack.c.h.b16 %v1924
    %v2279 = vunpack.c.l.b16 %v1925
    %v2280 = vunpack.c.h.b16 %v1925
    %v2281 = vunpack.c.l.b16 %v1926
    %v2282 = vunpack.c.h.b16 %v1926
    %v2283 = vunpack.c.l.b16 %v1927
    %v2284 = vunpack.c.h.b16 %v1927
    %v2285 = vunpack.c.l.b16 %v1928
    %v2286 = vunpack.c.h.b16 %v1928
    %v2287 = vunpack.c.l.b16 %v1929
    %v2288 = vunpack.c.h.b16 %v1929
    %v2289 = vunpack.c.l.b16 %v1930
    %v2290 = vunpack.c.h.b16 %v1930
    %v2291 = vunpack.c.l.b16 %v1931
    %v2292 = vunpack.c.h.b16 %v1931
    %v2293 = vunpack.c.l.b16 %v1932
    %v2294 = vunpack.c.h.b16 %v1932
    %v2295 = vunpack.c.l.b16 %v1933
    %v2296 = vunpack.c.h.b16 %v1933
    %v2297 = vunpack.c.l.b16 %v1934
    %v2298 = vunpack.c.h.b16 %v1934
    %v2299 = vunpack.c.l.b16 %v1935
    %v2300 = vunpack.c.h.b16 %v1935
    %v2301 = vunpack.c.l.b16 %v1936
    %v2302 = vunpack.c.h.b16 %v1936
    %v2303 = vunpack.c.l.b16 %v1937
    %v2304 = vunpack.c.h.b16 %v1937
    %v2305 = vunpack.c.l.b16 %v1938
    %v2306 = vunpack.c.h.b16 %v1938
    %v2307 = vunpack.c.l.b16 %v1939
    %v2308 = vunpack.c.h.b16 %v1939
    %v2309 = vunpack.c.l.b16 %v1940
    %v2310 = vunpack.c.h.b16 %v1940
    %v2311 = vunpack.c.l.b16 %v1941
    %v2312 = vunpack.c.h.b16 %v1941
    %v2313 = vunpack.c.l.b16 %v1942
    %v2314 = vunpack.c.h.b16 %v1942
    %v2315 = vunpack.c.l.b16 %v1943
    %v2316 = vunpack.c.h.b16 %v1943
    %v2317 = vunpack.c.l.b16 %v1944
    %v2318 = vunpack.c.h.b16 %v1944
    %v2319 = vunpack.c.l.b16 %v1945
    %v2320 = vunpack.c.h.b16 %v1945
    %v2321 = vunpack.c.l.b16 %v1946
    %v2322 = vunpack.c.h.b16 %v1946
    %v2323 = vunpack.c.l.b16 %v1947
    %v2324 = vunpack.c.h.b16 %v1947
    %v2325 = vunpack.c.l.b16 %v1948
    %v2326 = vunpack.c.h.b16 %v1948
    %v2327 = vunpack.c.l.b16 %v1949
    %v2328 = vunpack.c.h.b16 %v1949
    %v2329 = vunpack.c.l.b16 %v1950
    %v2330 = vunpack.c.h.b16 %v1950
    %v2331 = vunpack.c.l.b16 %v1951
    %v2332 = vunpack.c.h.b16 %v1951
    %v2333 = vunpack.c.l.b16 %v1952
    %v2334 = vunpack.c.h.b16 %v1952
    %v2335 = vunpack.c.l.b16 %v1953
    %v2336 = vunpack.c.h.b16 %v1953
    %v2337 = vunpack.c.l.b16 %v1954
    %v2338 = vunpack.c.h.b16 %v1954
    %v2339 = vpack.c.b16 %v2087, %v2083
    %v2340 = vpack.c.b16 %v2088, %v2084
    %v2341 = vpack.c.b16 %v2089, %v2085
    %v2342 = vpack.c.b16 %v2090, %v2086
    %v2343 = vpack.c.b16 %v2095, %v2091
    %v2344 = vpack.c.b16 %v2096, %v2092
    %v2345 = vpack.c.b16 %v2097, %v2093
    %v2346 = vpack.c.b16 %v2098, %v2094
    %v2347 = vpack.c.b16 %v2103, %v2099
    %v2348 = vpack.c.b16 %v2104, %v2100
    %v2349 = vpack.c.b16 %v2105, %v2101
    %v2350 = vpack.c.b16 %v2106, %v2102
    %v2351 = vpack.c.b16 %v2111, %v2107
    %v2352 = vpack.c.b16 %v2112, %v2108
    %v2353 = vpack.c.b16 %v2113, %v2109
    %v2354 = vpack.c.b16 %v2114, %v2110
    %v2355 = vpack.c.b16 %v2119, %v2115
    %v2356 = vpack.c.b16 %v2120, %v2116
    %v2357 = vpack.c.b16 %v2121, %v2117
    %v2358 = vpack.c.b16 %v2122, %v2118
    %v2359 = vpack.c.b16 %v2127, %v2123
    %v2360 = vpack.c.b16 %v2128, %v2124
    %v2361 = vpack.c.b16 %v2129, %v2125
    %v2362 = vpack.c.b16 %v2130, %v2126
    %v2363 = vpack.c.b16 %v2135, %v2131
    %v2364 = vpack.c.b16 %v2136, %v2132
    %v2365 = vpack.c.b16 %v2137, %v2133
    %v2366 = vpack.c.b16 %v2138, %v2134
    %v2367 = vpack.c.b16 %v2143, %v2139
    %v2368 = vpack.c.b16 %v2144, %v2140
    %v2369 = vpack.c.b16 %v2145, %v2141
    %v2370 = vpack.c.b16 %v2146, %v2142
    %v2371 = vpack.c.b16 %v2151, %v2147
    %v2372 = vpack.c.b16 %v2152, %v2148
    %v2373 = vpack.c.b16 %v2153, %v2149
    %v2374 = vpack.c.b16 %v2154, %v2150
    %v2375 = vpack.c.b16 %v2159, %v2155
    %v2376 = vpack.c.b16 %v2160, %v2156
    %v2377 = vpack.c.b16 %v2161, %v2157
    %v2378 = vpack.c.b16 %v2162, %v2158
    %v2379 = vpack.c.b16 %v2167, %v2163
    %v2380 = vpack.c.b16 %v2168, %v2164
    %v2381 = vpack.c.b16 %v2169, %v2165
    %v2382 = vpack.c.b16 %v2170, %v2166
    %v2383 = vpack.c.b16 %v2175, %v2171
    %v2384 = vpack.c.b16 %v2176, %v2172
    %v2385 = vpack.c.b16 %v2177, %v2173
    %v2386 = vpack.c.b16 %v2178, %v2174
    %v2387 = vpack.c.b16 %v2183, %v2179
    %v2388 = vpack.c.b16 %v2184, %v2180
    %v2389 = vpack.c.b16 %v2185, %v2181
    %v2390 = vpack.c.b16 %v2186, %v2182
    %v2391 = vpack.c.b16 %v2191, %v2187
    %v2392 = vpack.c.b16 %v2192, %v2188
    %v2393 = vpack.c.b16 %v2193, %v2189
    %v2394 = vpack.c.b16 %v2194, %v2190
    %v2395 = vpack.c.b16 %v2199, %v2195
    %v2396 = vpack.c.b16 %v2200, %v2196
    %v2397 = vpack.c.b16 %v2201, %v2197
    %v2398 = vpack.c.b16 %v2202, %v2198
    %v2399 = vpack.c.b16 %v2207, %v2203
    %v2400 = vpack.c.b16 %v2208, %v2204
    %v2401 = vpack.c.b16 %v2209, %v2205
    %v2402 = vpack.c.b16 %v2210, %v2206
    %v2403 = vpack.c.b16 %v2215, %v2211
    %v2404 = vpack.c.b16 %v2216, %v2212
    %v2405 = vpack.c.b16 %v2217, %v2213
    %v2406 = vpack.c.b16 %v2218, %v2214
    %v2407 = vpack.c.b16 %v2223, %v2219
    %v2408 = vpack.c.b16 %v2224, %v2220
    %v2409 = vpack.c.b16 %v2225, %v2221
    %v2410 = vpack.c.b16 %v2226, %v2222
    %v2411 = vpack.c.b16 %v2231, %v2227
    %v2412 = vpack.c.b16 %v2232, %v2228
    %v2413 = vpack.c.b16 %v2233, %v2229
    %v2414 = vpack.c.b16 %v2234, %v2230
    %v2415 = vpack.c.b16 %v2239, %v2235
    %v2416 = vpack.c.b16 %v2240, %v2236
    %v2417 = vpack.c.b16 %v2241, %v2237
    %v2418 = vpack.c.b16 %v2242, %v2238
    %v2419 = vpack.c.b16 %v2247, %v2243
    %v2420 = vpack.c.b16 %v2248, %v2244
    %v2421 = vpack.c.b16 %v2249, %v2245
    %v2422 = vpack.c.b16 %v2250, %v2246
    %v2423 = vpack.c.b16 %v2255, %v2251
    %v2424 = vpack.c.b16 %v2256, %v2252
    %v2425 = vpack.c.b16 %v2257, %v2253
    %v2426 = vpack.c.b16 %v2258, %v2254
    %v2427 = vpack.c.b16 %v2263, %v2259
    %v2428 = vpack.c.b16 %v2264, %v2260
    %v2429 = vpack.c.b16 %v2265, %v2261
    %v2430 = vpack.c.b16 %v2266, %v2262
    %v2431 = vpack.c.b16 %v2271, %v2267
    %v2432 = vpack.c.b16 %v2272, %v2268
    %v2433 = vpack.c.b16 %v2273, %v2269
    %v2434 = vpack.c.b16 %v2274, %v2270
    %v2435 = vpack.c.b16 %v2279, %v2275
    %v2436 = vpack.c.b16 %v2280, %v2276
    %v2437 = vpack.c.b16 %v2281, %v2277
    %v2438 = vpack.c.b16 %v2282, %v2278
    %v2439 = vpack.c.b16 %v2287, %v2283
    %v2440 = vpack.c.b16 %v2288, %v2284
    %v2441 = vpack.c.b16 %v2289, %v2285
    %v2442 = vpack.c.b16 %v2290, %v2286
    %v2443 = vpack.c.b16 %v2295, %v2291
    %v2444 = vpack.c.b16 %v2296, %v2292
    %v2445 = vpack.c.b16 %v2297, %v2293
    %v2446 = vpack.c.b16 %v2298, %v2294
    %v2447 = vpack.c.b16 %v2303, %v2299
    %v2448 = vpack.c.b16 %v2304, %v2300
    %v2449 = vpack.c.b16 %v2305, %v2301
    %v2450 = vpack.c.b16 %v2306, %v2302
    %v2451 = vpack.c.b16 %v2311, %v2307
    %v2452 = vpack.c.b16 %v2312, %v2308
    %v2453 = vpack.c.b16 %v2313, %v2309
    %v2454 = vpack.c.b16 %v2314, %v2310
    %v2455 = vpack.c.b16 %v2319, %v2315
    %v2456 = vpack.c.b16 %v2320, %v2316
    %v2457 = vpack.c.b16 %v2321, %v2317
    %v2458 = vpack.c.b16 %v2322, %v2318
    %v2459 = vpack.c.b16 %v2327, %v2323
    %v2460 = vpack.c.b16 %v2328, %v2324
    %v2461 = vpack.c.b16 %v2329, %v2325
    %v2462 = vpack.c.b16 %v2330, %v2326
    %v2463 = vpack.c.b16 %v2335, %v2331
    %v2464 = vpack.c.b16 %v2336, %v2332
    %v2465 = vpack.c.b16 %v2337, %v2333
    %v2466 = vpack.c.b16 %v2338, %v2334
    %2595 = vmatprep.subr.bf16.mxu0 %v2340
    %2596 = vmatpush1.bf16.msra.mxu0 %v2339
    %2597 = vmatprep.subr.bf16.mxu0 %v2344
    %2598 = vmatpush1.bf16.msra.mxu0 %v2343
    %2599 = vmatprep.subr.bf16.mxu0 %v2348
    %2600 = vmatpush1.bf16.msra.mxu0 %v2347
    %2601 = vmatprep.subr.bf16.mxu0 %v2352
    %2602 = vmatpush1.bf16.msra.mxu0 %v2351
    %2603 = vmatprep.subr.bf16.mxu0 %v2356
    %2604 = vmatpush1.bf16.msra.mxu0 %v2355
    %2605 = vmatprep.subr.bf16.mxu0 %v2360
    %2606 = vmatpush1.bf16.msra.mxu0 %v2359
    %2607 = vmatprep.subr.bf16.mxu0 %v2364
    %2608 = vmatpush1.bf16.msra.mxu0 %v2363
    %2609 = vmatprep.subr.bf16.mxu0 %v2368
    %2610 = vmatpush1.bf16.msra.mxu0 %v2367
    %2611 = vmatprep.subr.bf16.mxu0 %v2372
    %2612 = vmatpush1.bf16.msra.mxu0 %v2371
    %2613 = vmatprep.subr.bf16.mxu0 %v2376
    %2614 = vmatpush1.bf16.msra.mxu0 %v2375
    %2615 = vmatprep.subr.bf16.mxu0 %v2380
    %2616 = vmatpush1.bf16.msra.mxu0 %v2379
    %2617 = vmatprep.subr.bf16.mxu0 %v2384
    %2618 = vmatpush1.bf16.msra.mxu0 %v2383
    %2619 = vmatprep.subr.bf16.mxu0 %v2388
    %2620 = vmatpush1.bf16.msra.mxu0 %v2387
    %2621 = vmatprep.subr.bf16.mxu0 %v2392
    %2622 = vmatpush1.bf16.msra.mxu0 %v2391
    %2623 = vmatprep.subr.bf16.mxu0 %v2396
    %2624 = vmatpush1.bf16.msra.mxu0 %v2395
    %2625 = vmatprep.subr.bf16.mxu0 %v2400
    %2626 = vmatpush1.bf16.msra.mxu0 %v2399
    %2627 = vmatprep.mubr.bf16.mxu0 %v1824
    %2628 = vmatmul.mubr.bf16.gmra.mrb[0].mxu0 %v1823
    %v2629 = vpop.f32.mrb[0].mxu0
    %v2630 = vadd.f32 0.0, %v2629
    %v2631 = vpop.f32.mrb[0].mxu0
    %v2632 = vadd.f32 0.0, %v2631
    %v2633 = vpop.f32.mrb[0].mxu0
    %v2634 = vpop.f32.mrb[0].mxu0
    %2635 = vdwg.mxu0
    %2636 = vmatprep.subr.bf16.mxu0 %v2404
    %2637 = vmatpush1.bf16.msra.mxu0 %v2403
    %2638 = vmatprep.subr.bf16.mxu0 %v2408
    %2639 = vmatpush1.bf16.msra.mxu0 %v2407
    %2640 = vmatprep.subr.bf16.mxu0 %v2412
    %2641 = vmatpush1.bf16.msra.mxu0 %v2411
    %2642 = vmatprep.subr.bf16.mxu0 %v2416
    %2643 = vmatpush1.bf16.msra.mxu0 %v2415
    %2644 = vmatprep.subr.bf16.mxu0 %v2420
    %2645 = vmatpush1.bf16.msra.mxu0 %v2419
    %2646 = vmatprep.subr.bf16.mxu0 %v2424
    %2647 = vmatpush1.bf16.msra.mxu0 %v2423
    %2648 = vmatprep.subr.bf16.mxu0 %v2428
    %2649 = vmatpush1.bf16.msra.mxu0 %v2427
    %2650 = vmatprep.subr.bf16.mxu0 %v2432
    %2651 = vmatpush1.bf16.msra.mxu0 %v2431
    %2652 = vmatprep.subr.bf16.mxu0 %v2436
    %2653 = vmatpush1.bf16.msra.mxu0 %v2435
    %2654 = vmatprep.subr.bf16.mxu0 %v2440
    %2655 = vmatpush1.bf16.msra.mxu0 %v2439
    %2656 = vmatprep.subr.bf16.mxu0 %v2444
    %2657 = vmatpush1.bf16.msra.mxu0 %v2443
    %2658 = vmatprep.subr.bf16.mxu0 %v2448
    %2659 = vmatpush1.bf16.msra.mxu0 %v2447
    %2660 = vmatprep.subr.bf16.mxu0 %v2452
    %2661 = vmatpush1.bf16.msra.mxu0 %v2451
    %2662 = vmatprep.subr.bf16.mxu0 %v2456
    %2663 = vmatpush1.bf16.msra.mxu0 %v2455
    %2664 = vmatprep.subr.bf16.mxu0 %v2460
    %2665 = vmatpush1.bf16.msra.mxu0 %v2459
    %2666 = vmatprep.subr.bf16.mxu0 %v2464
    %2667 = vmatpush1.bf16.msra.mxu0 %v2463
    %2668 = vmatprep.mubr.bf16.mxu0 %v1826
    %2669 = vmatmul.mubr.bf16.gmra.mrb[0].mxu0 %v1825
    %v2670 = vpop.f32.mrb[0].mxu0
    %v2671 = vadd.f32 %v2630, %v2670
    %v2672 = vpop.f32.mrb[0].mxu0
    %v2673 = vadd.f32 %v2632, %v2672
    %v2674 = vpop.f32.mrb[0].mxu0
    %v2675 = vpop.f32.mrb[0].mxu0
    %2676 = vdwg.mxu0
    %2677 = vmatprep.subr.bf16.mxu0 %v2342
    %2678 = vmatpush1.bf16.msra.mxu0 %v2341
    %2679 = vmatprep.subr.bf16.mxu0 %v2346
    %2680 = vmatpush1.bf16.msra.mxu0 %v2345
    %2681 = vmatprep.subr.bf16.mxu0 %v2350
    %2682 = vmatpush1.bf16.msra.mxu0 %v2349
    %2683 = vmatprep.subr.bf16.mxu0 %v2354
    %2684 = vmatpush1.bf16.msra.mxu0 %v2353
    %2685 = vmatprep.subr.bf16.mxu0 %v2358
    %2686 = vmatpush1.bf16.msra.mxu0 %v2357
    %2687 = vmatprep.subr.bf16.mxu0 %v2362
    %2688 = vmatpush1.bf16.msra.mxu0 %v2361
    %2689 = vmatprep.subr.bf16.mxu0 %v2366
    %2690 = vmatpush1.bf16.msra.mxu0 %v2365
    %2691 = vmatprep.subr.bf16.mxu0 %v2370
    %2692 = vmatpush1.bf16.msra.mxu0 %v2369
    %2693 = vmatprep.subr.bf16.mxu0 %v2374
    %2694 = vmatpush1.bf16.msra.mxu0 %v2373
    %2695 = vmatprep.subr.bf16.mxu0 %v2378
    %2696 = vmatpush1.bf16.msra.mxu0 %v2377
    %2697 = vmatprep.subr.bf16.mxu0 %v2382
    %2698 = vmatpush1.bf16.msra.mxu0 %v2381
    %2699 = vmatprep.subr.bf16.mxu0 %v2386
    %2700 = vmatpush1.bf16.msra.mxu0 %v2385
    %2701 = vmatprep.subr.bf16.mxu0 %v2390
    %2702 = vmatpush1.bf16.msra.mxu0 %v2389
    %2703 = vmatprep.subr.bf16.mxu0 %v2394
    %2704 = vmatpush1.bf16.msra.mxu0 %v2393
    %2705 = vmatprep.subr.bf16.mxu0 %v2398
    %2706 = vmatpush1.bf16.msra.mxu0 %v2397
    %2707 = vmatprep.subr.bf16.mxu0 %v2402
    %2708 = vmatpush1.bf16.msra.mxu0 %v2401
    %2709 = vmatprep.mubr.bf16.mxu0 %v1824
    %2710 = vmatmul.mubr.bf16.gmra.mrb[0].mxu0 %v1823
    %v2711 = vpop.f32.mrb[0].mxu0
    %v2712 = vadd.f32 0.0, %v2711
    %v2713 = vpop.f32.mrb[0].mxu0
    %v2714 = vadd.f32 0.0, %v2713
    %v2715 = vpop.f32.mrb[0].mxu0
    %v2716 = vpop.f32.mrb[0].mxu0
    %2717 = vdwg.mxu0
    %2718 = vmatprep.subr.bf16.mxu0 %v2406
    %2719 = vmatpush1.bf16.msra.mxu0 %v2405
    %2720 = vmatprep.subr.bf16.mxu0 %v2410
    %2721 = vmatpush1.bf16.msra.mxu0 %v2409
    %2722 = vmatprep.subr.bf16.mxu0 %v2414
    %2723 = vmatpush1.bf16.msra.mxu0 %v2413
    %2724 = vmatprep.subr.bf16.mxu0 %v2418
    %2725 = vmatpush1.bf16.msra.mxu0 %v2417
    %2726 = vmatprep.subr.bf16.mxu0 %v2422
    %2727 = vmatpush1.bf16.msra.mxu0 %v2421
    %2728 = vmatprep.subr.bf16.mxu0 %v2426
    %2729 = vmatpush1.bf16.msra.mxu0 %v2425
    %2730 = vmatprep.subr.bf16.mxu0 %v2430
    %2731 = vmatpush1.bf16.msra.mxu0 %v2429
    %2732 = vmatprep.subr.bf16.mxu0 %v2434
    %2733 = vmatpush1.bf16.msra.mxu0 %v2433
    %2734 = vmatprep.subr.bf16.mxu0 %v2438
    %2735 = vmatpush1.bf16.msra.mxu0 %v2437
    %2736 = vmatprep.subr.bf16.mxu0 %v2442
    %2737 = vmatpush1.bf16.msra.mxu0 %v2441
    %2738 = vmatprep.subr.bf16.mxu0 %v2446
    %2739 = vmatpush1.bf16.msra.mxu0 %v2445
    %2740 = vmatprep.subr.bf16.mxu0 %v2450
    %2741 = vmatpush1.bf16.msra.mxu0 %v2449
    %2742 = vmatprep.subr.bf16.mxu0 %v2454
    %2743 = vmatpush1.bf16.msra.mxu0 %v2453
    %2744 = vmatprep.subr.bf16.mxu0 %v2458
    %2745 = vmatpush1.bf16.msra.mxu0 %v2457
    %2746 = vmatprep.subr.bf16.mxu0 %v2462
    %2747 = vmatpush1.bf16.msra.mxu0 %v2461
    %2748 = vmatprep.subr.bf16.mxu0 %v2466
    %2749 = vmatpush1.bf16.msra.mxu0 %v2465
    %2750 = vmatprep.mubr.bf16.mxu0 %v1826
    %2751 = vmatmul.mubr.bf16.gmra.mrb[0].mxu0 %v1825
    %v2752 = vpop.f32.mrb[0].mxu0
    %v2753 = vadd.f32 %v2712, %v2752
    %v2754 = vpop.f32.mrb[0].mxu0
    %v2755 = vadd.f32 %v2714, %v2754
    %v2756 = vpop.f32.mrb[0].mxu0
    %v2757 = vpop.f32.mrb[0].mxu0
    %2758 = vdwg.mxu0
    %v2759 = vld [vmem:[%s5] sm:$0xf]
    %v2760 = vld [vmem:[%s6] sm:$0xf]
    %v2761 = vrot.slane %v2671, 4
    %v2762 = vadd.f32 %v2671, %v2761
    %v2763 = vrot.slane %v2762, 2
    %v2764 = vadd.f32 %v2762, %v2763
    %v2765 = vrot.slane %v2764, 1
    %v2766 = vadd.f32 %v2764, %v2765
    %v2767 = vrot.slane %v2673, 4
    %v2768 = vadd.f32 %v2673, %v2767
    %v2769 = vrot.slane %v2768, 2
    %v2770 = vadd.f32 %v2768, %v2769
    %v2771 = vrot.slane %v2770, 1
    %v2772 = vadd.f32 %v2770, %v2771
    %v2773 = vrot.slane %v2753, 4
    %v2774 = vadd.f32 %v2753, %v2773
    %v2775 = vrot.slane %v2774, 2
    %v2776 = vadd.f32 %v2774, %v2775
    %v2777 = vrot.slane %v2776, 1
    %v2778 = vadd.f32 %v2776, %v2777
    %v2779 = vrot.slane %v2755, 4
    %v2780 = vadd.f32 %v2755, %v2779
    %v2781 = vrot.slane %v2780, 2
    %v2782 = vadd.f32 %v2780, %v2781
    %v2783 = vrot.slane %v2782, 1
    %v2784 = vadd.f32 %v2782, %v2783
    %v2785 = vmul.f32 %v2766, 0.125
    %v2786 = vmul.f32 %v2772, 0.125
    %v2787 = vmul.f32 %v2778, 0.125
    %v2788 = vmul.f32 %v2784, 0.125
    %v2789 = vmul.f32 %v2671, %v2671
    %v2790 = vmul.f32 %v2673, %v2673
    %v2791 = vmul.f32 %v2753, %v2753
    %v2792 = vmul.f32 %v2755, %v2755
    %v2793 = vrot.slane %v2789, 4
    %v2794 = vadd.f32 %v2789, %v2793
    %v2795 = vrot.slane %v2794, 2
    %v2796 = vadd.f32 %v2794, %v2795
    %v2797 = vrot.slane %v2796, 1
    %v2798 = vadd.f32 %v2796, %v2797
    %v2799 = vrot.slane %v2790, 4
    %v2800 = vadd.f32 %v2790, %v2799
    %v2801 = vrot.slane %v2800, 2
    %v2802 = vadd.f32 %v2800, %v2801
    %v2803 = vrot.slane %v2802, 1
    %v2804 = vadd.f32 %v2802, %v2803
    %v2805 = vrot.slane %v2791, 4
    %v2806 = vadd.f32 %v2791, %v2805
    %v2807 = vrot.slane %v2806, 2
    %v2808 = vadd.f32 %v2806, %v2807
    %v2809 = vrot.slane %v2808, 1
    %v2810 = vadd.f32 %v2808, %v2809
    %v2811 = vrot.slane %v2792, 4
    %v2812 = vadd.f32 %v2792, %v2811
    %v2813 = vrot.slane %v2812, 2
    %v2814 = vadd.f32 %v2812, %v2813
    %v2815 = vrot.slane %v2814, 1
    %v2816 = vadd.f32 %v2814, %v2815
    %v2817 = vmul.f32 %v2798, 0.125
    %v2818 = vmul.f32 %v2804, 0.125
    %v2819 = vmul.f32 %v2810, 0.125
    %v2820 = vmul.f32 %v2816, 0.125
    %v2821 = vmul.f32 %v2785, %v2785
    %v2822 = vmul.f32 %v2786, %v2786
    %v2823 = vmul.f32 %v2787, %v2787
    %v2824 = vmul.f32 %v2788, %v2788
    %v2825 = vsub.f32 %v2817, %v2821
    %v2826 = vsub.f32 %v2818, %v2822
    %v2827 = vsub.f32 %v2819, %v2823
    %v2828 = vsub.f32 %v2820, %v2824
    %v2829 = vmax.f32 %v2825, 0.0
    %v2830 = vmax.f32 %v2826, 0.0
    %v2831 = vmax.f32 %v2827, 0.0
    %v2832 = vmax.f32 %v2828, 0.0
    %v2833 = vadd.f32 %v2829, 1e-05
    %v2834 = vadd.f32 %v2830, 1e-05
    %v2835 = vadd.f32 %v2831, 1e-05
    %v2836 = vadd.f32 %v2832, 1e-05
    %v2837 = vrsqrt.pop %v2833
    %v2838 = vrsqrt.pop %v2834
    %v2839 = vrsqrt.pop %v2835
    %v2840 = vrsqrt.pop %v2836
    %v2845 = vcombine.low %v2837, %v2838
    %v2846 = vcombine.low %v2839, %v2840
    %v2848 = vunpack.c.l.s4 1966171168
    %v2849 = vunpack.c.0.s8 %v2848
    %v2850 = vlaneseq
    %v2851 = vshrl.u32 %v2850, 7
    %v2852 = vsub.s32 %v2849, %v2851
    %v2853 = vrot.slane %v2845, %v2852
    %v2855 = vunpack.c.l.s4 1966171168
    %v2856 = vunpack.c.0.s8 %v2855
    %v2857 = vlaneseq
    %v2858 = vshrl.u32 %v2857, 7
    %v2859 = vsub.s32 %v2856, %v2858
    %v2860 = vrot.slane %v2846, %v2859
    %v2861 = vcombine.low %v2853, %v2860
    %v2863 = vunpack.c.l.s4 1966171168
    %v2864 = vunpack.c.0.s8 %v2863
    %v2865 = vlaneseq
    %v2866 = vshrl.u32 %v2865, 7
    %v2867 = vsub.s32 %v2864, %v2866
    %v2868 = vrot.slane %v2861, %v2867
    %v2870 = vmul.f32 %v2759, %v2868
    %v2872 = vlaneseq
    %v2873 = vshrl.u32 %v2872, 7
    %v2874 = vsub.s32 0, %v2873
    %v2875 = vrot.slane %v2870, %v2874
    %v2876 = vlaneseq
    %v2877 = vshrl.u32 %v2876, 7
    %v2878 = vsub.s32 1, %v2877
    %v2879 = vrot.slane %v2870, %v2878
    %v2880 = vlaneseq
    %v2881 = vshrl.u32 %v2880, 7
    %v2882 = vsub.s32 2, %v2881
    %v2883 = vrot.slane %v2870, %v2882
    %v2884 = vlaneseq
    %v2885 = vshrl.u32 %v2884, 7
    %v2886 = vsub.s32 3, %v2885
    %v2887 = vrot.slane %v2870, %v2886
    %v2892 = vmul.f32 %v2785, %v2875
    %v2893 = vmul.f32 %v2786, %v2879
    %v2894 = vmul.f32 %v2787, %v2883
    %v2895 = vmul.f32 %v2788, %v2887
    %v2900 = vcombine.low %v2892, %v2893
    %v2901 = vcombine.low %v2894, %v2895
    %v2903 = vunpack.c.l.s4 1966171168
    %v2904 = vunpack.c.0.s8 %v2903
    %v2905 = vlaneseq
    %v2906 = vshrl.u32 %v2905, 7
    %v2907 = vsub.s32 %v2904, %v2906
    %v2908 = vrot.slane %v2900, %v2907
    %v2910 = vunpack.c.l.s4 1966171168
    %v2911 = vunpack.c.0.s8 %v2910
    %v2912 = vlaneseq
    %v2913 = vshrl.u32 %v2912, 7
    %v2914 = vsub.s32 %v2911, %v2913
    %v2915 = vrot.slane %v2901, %v2914
    %v2916 = vcombine.low %v2908, %v2915
    %v2918 = vunpack.c.l.s4 1966171168
    %v2919 = vunpack.c.0.s8 %v2918
    %v2920 = vlaneseq
    %v2921 = vshrl.u32 %v2920, 7
    %v2922 = vsub.s32 %v2919, %v2921
    %v2923 = vrot.slane %v2916, %v2922
    %v2925 = vsub.f32 %v2760, %v2923
    %v2926 = vmul.f32 %v2671, %v2875
    %v2927 = vmul.f32 %v2673, %v2879
    %v2928 = vmul.f32 %v2753, %v2883
    %v2929 = vmul.f32 %v2755, %v2887
    %v2931 = vlaneseq
    %v2932 = vshrl.u32 %v2931, 7
    %v2933 = vsub.s32 0, %v2932
    %v2934 = vrot.slane %v2925, %v2933
    %v2935 = vlaneseq
    %v2936 = vshrl.u32 %v2935, 7
    %v2937 = vsub.s32 1, %v2936
    %v2938 = vrot.slane %v2925, %v2937
    %v2939 = vlaneseq
    %v2940 = vshrl.u32 %v2939, 7
    %v2941 = vsub.s32 2, %v2940
    %v2942 = vrot.slane %v2925, %v2941
    %v2943 = vlaneseq
    %v2944 = vshrl.u32 %v2943, 7
    %v2945 = vsub.s32 3, %v2944
    %v2946 = vrot.slane %v2925, %v2945
    %v2951 = vadd.f32 %v2926, %v2934
    %v2952 = vadd.f32 %v2927, %v2938
    %v2953 = vadd.f32 %v2928, %v2942
    %v2954 = vadd.f32 %v2929, %v2946
    %v2955 = vmax.f32 %v2951, 0.0
    %v2956 = vmax.f32 %v2952, 0.0
    %v2957 = vmax.f32 %v2953, 0.0
    %v2958 = vmax.f32 %v2954, 0.0
    %v2959 = vpack.c.bf16 %v2955, %v2955
    %v2960 = vpack.c.bf16 %v2956, %v2956
    %v2961 = vpack.c.bf16 %v2957, %v2957
    %v2962 = vpack.c.bf16 %v2958, %v2958
    %v2963 = vld [vmem:[#allocation8] sm:$0xf]
    %v2964 = vld [vmem:[#allocation8 + $0x4] sm:$0xf]
    %v2965 = vld [vmem:[#allocation8 + $0x8] sm:$0xf]
    %v2966 = vld [vmem:[#allocation8 + $0xc] sm:$0xf]
    %v2967 = vld [vmem:[#allocation8 + $0x10] sm:$0xf]
    %v2968 = vld [vmem:[#allocation8 + $0x14] sm:$0xf]
    %v2969 = vld [vmem:[#allocation8 + $0x18] sm:$0xf]
    %v2970 = vld [vmem:[#allocation8 + $0x1c] sm:$0xf]
    %v2971 = vld [vmem:[#allocation8 + $0x20] sm:$0xf]
    %v2972 = vld [vmem:[#allocation8 + $0x24] sm:$0xf]
    %v2973 = vld [vmem:[#allocation8 + $0x28] sm:$0xf]
    %v2974 = vld [vmem:[#allocation8 + $0x2c] sm:$0xf]
    %v2975 = vld [vmem:[#allocation8 + $0x30] sm:$0xf]
    %v2976 = vld [vmem:[#allocation8 + $0x34] sm:$0xf]
    %v2977 = vld [vmem:[#allocation8 + $0x38] sm:$0xf]
    %v2978 = vld [vmem:[#allocation8 + $0x3c] sm:$0xf]
    %v2979 = vld [vmem:[#allocation8 + $0x40] sm:$0xf]
    %v2980 = vld [vmem:[#allocation8 + $0x44] sm:$0xf]
    %v2981 = vld [vmem:[#allocation8 + $0x48] sm:$0xf]
    %v2982 = vld [vmem:[#allocation8 + $0x4c] sm:$0xf]
    %v2983 = vld [vmem:[#allocation8 + $0x50] sm:$0xf]
    %v2984 = vld [vmem:[#allocation8 + $0x54] sm:$0xf]
    %v2985 = vld [vmem:[#allocation8 + $0x58] sm:$0xf]
    %v2986 = vld [vmem:[#allocation8 + $0x5c] sm:$0xf]
    %v2987 = vld [vmem:[#allocation8 + $0x60] sm:$0xf]
    %v2988 = vld [vmem:[#allocation8 + $0x64] sm:$0xf]
    %v2989 = vld [vmem:[#allocation8 + $0x68] sm:$0xf]
    %v2990 = vld [vmem:[#allocation8 + $0x6c] sm:$0xf]
    %v2991 = vld [vmem:[#allocation8 + $0x70] sm:$0xf]
    %v2992 = vld [vmem:[#allocation8 + $0x74] sm:$0xf]
    %v2993 = vld [vmem:[#allocation8 + $0x78] sm:$0xf]
    %v2994 = vld [vmem:[#allocation8 + $0x7c] sm:$0xf]
    %v2995 = vld [vmem:[#allocation8 + $0x80] sm:$0xf]
    %v2996 = vld [vmem:[#allocation8 + $0x84] sm:$0xf]
    %v2997 = vld [vmem:[#allocation8 + $0x88] sm:$0xf]
    %v2998 = vld [vmem:[#allocation8 + $0x8c] sm:$0xf]
    %v2999 = vld [vmem:[#allocation8 + $0x90] sm:$0xf]
    %v3000 = vld [vmem:[#allocation8 + $0x94] sm:$0xf]
    %v3001 = vld [vmem:[#allocation8 + $0x98] sm:$0xf]
    %v3002 = vld [vmem:[#allocation8 + $0x9c] sm:$0xf]
    %v3003 = vld [vmem:[#allocation8 + $0xa0] sm:$0xf]
    %v3004 = vld [vmem:[#allocation8 + $0xa4] sm:$0xf]
    %v3005 = vld [vmem:[#allocation8 + $0xa8] sm:$0xf]
    %v3006 = vld [vmem:[#allocation8 + $0xac] sm:$0xf]
    %v3007 = vld [vmem:[#allocation8 + $0xb0] sm:$0xf]
    %v3008 = vld [vmem:[#allocation8 + $0xb4] sm:$0xf]
    %v3009 = vld [vmem:[#allocation8 + $0xb8] sm:$0xf]
    %v3010 = vld [vmem:[#allocation8 + $0xbc] sm:$0xf]
    %v3011 = vld [vmem:[#allocation8 + $0xc0] sm:$0xf]
    %v3012 = vld [vmem:[#allocation8 + $0xc4] sm:$0xf]
    %v3013 = vld [vmem:[#allocation8 + $0xc8] sm:$0xf]
    %v3014 = vld [vmem:[#allocation8 + $0xcc] sm:$0xf]
    %v3015 = vld [vmem:[#allocation8 + $0xd0] sm:$0xf]
    %v3016 = vld [vmem:[#allocation8 + $0xd4] sm:$0xf]
    %v3017 = vld [vmem:[#allocation8 + $0xd8] sm:$0xf]
    %v3018 = vld [vmem:[#allocation8 + $0xdc] sm:$0xf]
    %v3019 = vld [vmem:[#allocation8 + $0xe0] sm:$0xf]
    %v3020 = vld [vmem:[#allocation8 + $0xe4] sm:$0xf]
    %v3021 = vld [vmem:[#allocation8 + $0xe8] sm:$0xf]
    %v3022 = vld [vmem:[#allocation8 + $0xec] sm:$0xf]
    %v3023 = vld [vmem:[#allocation8 + $0xf0] sm:$0xf]
    %v3024 = vld [vmem:[#allocation8 + $0xf4] sm:$0xf]
    %v3025 = vld [vmem:[#allocation8 + $0xf8] sm:$0xf]
    %v3026 = vld [vmem:[#allocation8 + $0xfc] sm:$0xf]
    %v3027 = vld [vmem:[%s8] sm:$0x1]
    %v3029 = vlaneseq
    %v3030 = vshrl.u32 %v3029, 7
    %v3031 = vsub.s32 0, %v3030
    %v3032 = vrot.slane %v3027, %v3031
    %v3098 = vunpack.c.l.b16 %v2963
    %v3099 = vunpack.c.l.b16 %v2964
    %v3100 = vunpack.c.l.b16 %v2965
    %v3101 = vunpack.c.l.b16 %v2966
    %v3102 = vunpack.c.l.b16 %v2967
    %v3103 = vunpack.c.l.b16 %v2968
    %v3104 = vunpack.c.l.b16 %v2969
    %v3105 = vunpack.c.l.b16 %v2970
    %v3106 = vunpack.c.l.b16 %v2971
    %v3107 = vunpack.c.l.b16 %v2972
    %v3108 = vunpack.c.l.b16 %v2973
    %v3109 = vunpack.c.l.b16 %v2974
    %v3110 = vunpack.c.l.b16 %v2975
    %v3111 = vunpack.c.l.b16 %v2976
    %v3112 = vunpack.c.l.b16 %v2977
    %v3113 = vunpack.c.l.b16 %v2978
    %v3114 = vunpack.c.l.b16 %v2979
    %v3115 = vunpack.c.l.b16 %v2980
    %v3116 = vunpack.c.l.b16 %v2981
    %v3117 = vunpack.c.l.b16 %v2982
    %v3118 = vunpack.c.l.b16 %v2983
    %v3119 = vunpack.c.l.b16 %v2984
    %v3120 = vunpack.c.l.b16 %v2985
    %v3121 = vunpack.c.l.b16 %v2986
    %v3122 = vunpack.c.l.b16 %v2987
    %v3123 = vunpack.c.l.b16 %v2988
    %v3124 = vunpack.c.l.b16 %v2989
    %v3125 = vunpack.c.l.b16 %v2990
    %v3126 = vunpack.c.l.b16 %v2991
    %v3127 = vunpack.c.l.b16 %v2992
    %v3128 = vunpack.c.l.b16 %v2993
    %v3129 = vunpack.c.l.b16 %v2994
    %v3130 = vunpack.c.l.b16 %v2995
    %v3131 = vunpack.c.l.b16 %v2996
    %v3132 = vunpack.c.l.b16 %v2997
    %v3133 = vunpack.c.l.b16 %v2998
    %v3134 = vunpack.c.l.b16 %v2999
    %v3135 = vunpack.c.l.b16 %v3000
    %v3136 = vunpack.c.l.b16 %v3001
    %v3137 = vunpack.c.l.b16 %v3002
    %v3138 = vunpack.c.l.b16 %v3003
    %v3139 = vunpack.c.l.b16 %v3004
    %v3140 = vunpack.c.l.b16 %v3005
    %v3141 = vunpack.c.l.b16 %v3006
    %v3142 = vunpack.c.l.b16 %v3007
    %v3143 = vunpack.c.l.b16 %v3008
    %v3144 = vunpack.c.l.b16 %v3009
    %v3145 = vunpack.c.l.b16 %v3010
    %v3146 = vunpack.c.l.b16 %v3011
    %v3147 = vunpack.c.l.b16 %v3012
    %v3148 = vunpack.c.l.b16 %v3013
    %v3149 = vunpack.c.l.b16 %v3014
    %v3150 = vunpack.c.l.b16 %v3015
    %v3151 = vunpack.c.l.b16 %v3016
    %v3152 = vunpack.c.l.b16 %v3017
    %v3153 = vunpack.c.l.b16 %v3018
    %v3154 = vunpack.c.l.b16 %v3019
    %v3155 = vunpack.c.l.b16 %v3020
    %v3156 = vunpack.c.l.b16 %v3021
    %v3157 = vunpack.c.l.b16 %v3022
    %v3158 = vunpack.c.l.b16 %v3023
    %v3159 = vunpack.c.l.b16 %v3024
    %v3160 = vunpack.c.l.b16 %v3025
    %v3161 = vunpack.c.l.b16 %v3026
    %v3162 = vpack.c.b16 %v3099, %v3098
    %v3163 = vpack.c.b16 %v3101, %v3100
    %v3164 = vpack.c.b16 %v3103, %v3102
    %v3165 = vpack.c.b16 %v3105, %v3104
    %v3166 = vpack.c.b16 %v3107, %v3106
    %v3167 = vpack.c.b16 %v3109, %v3108
    %v3168 = vpack.c.b16 %v3111, %v3110
    %v3169 = vpack.c.b16 %v3113, %v3112
    %v3170 = vpack.c.b16 %v3115, %v3114
    %v3171 = vpack.c.b16 %v3117, %v3116
    %v3172 = vpack.c.b16 %v3119, %v3118
    %v3173 = vpack.c.b16 %v3121, %v3120
    %v3174 = vpack.c.b16 %v3123, %v3122
    %v3175 = vpack.c.b16 %v3125, %v3124
    %v3176 = vpack.c.b16 %v3127, %v3126
    %v3177 = vpack.c.b16 %v3129, %v3128
    %v3178 = vpack.c.b16 %v3131, %v3130
    %v3179 = vpack.c.b16 %v3133, %v3132
    %v3180 = vpack.c.b16 %v3135, %v3134
    %v3181 = vpack.c.b16 %v3137, %v3136
    %v3182 = vpack.c.b16 %v3139, %v3138
    %v3183 = vpack.c.b16 %v3141, %v3140
    %v3184 = vpack.c.b16 %v3143, %v3142
    %v3185 = vpack.c.b16 %v3145, %v3144
    %v3186 = vpack.c.b16 %v3147, %v3146
    %v3187 = vpack.c.b16 %v3149, %v3148
    %v3188 = vpack.c.b16 %v3151, %v3150
    %v3189 = vpack.c.b16 %v3153, %v3152
    %v3190 = vpack.c.b16 %v3155, %v3154
    %v3191 = vpack.c.b16 %v3157, %v3156
    %v3192 = vpack.c.b16 %v3159, %v3158
    %v3193 = vpack.c.b16 %v3161, %v3160
    %3226 = vmatprep.subr.bf16.mxu0 0
    %3227 = vmatpush1.bf16.msra.mxu0 %v3162
    %3228 = vmatprep.subr.bf16.mxu0 0
    %3229 = vmatpush1.bf16.msra.mxu0 %v3163
    %3230 = vmatprep.subr.bf16.mxu0 0
    %3231 = vmatpush1.bf16.msra.mxu0 %v3164
    %3232 = vmatprep.subr.bf16.mxu0 0
    %3233 = vmatpush1.bf16.msra.mxu0 %v3165
    %3234 = vmatprep.subr.bf16.mxu0 0
    %3235 = vmatpush1.bf16.msra.mxu0 %v3166
    %3236 = vmatprep.subr.bf16.mxu0 0
    %3237 = vmatpush1.bf16.msra.mxu0 %v3167
    %3238 = vmatprep.subr.bf16.mxu0 0
    %3239 = vmatpush1.bf16.msra.mxu0 %v3168
    %3240 = vmatprep.subr.bf16.mxu0 0
    %3241 = vmatpush1.bf16.msra.mxu0 %v3169
    %3242 = vmatprep.subr.bf16.mxu0 0
    %3243 = vmatpush1.bf16.msra.mxu0 %v3170
    %3244 = vmatprep.subr.bf16.mxu0 0
    %3245 = vmatpush1.bf16.msra.mxu0 %v3171
    %3246 = vmatprep.subr.bf16.mxu0 0
    %3247 = vmatpush1.bf16.msra.mxu0 %v3172
    %3248 = vmatprep.subr.bf16.mxu0 0
    %3249 = vmatpush1.bf16.msra.mxu0 %v3173
    %3250 = vmatprep.subr.bf16.mxu0 0
    %3251 = vmatpush1.bf16.msra.mxu0 %v3174
    %3252 = vmatprep.subr.bf16.mxu0 0
    %3253 = vmatpush1.bf16.msra.mxu0 %v3175
    %3254 = vmatprep.subr.bf16.mxu0 0
    %3255 = vmatpush1.bf16.msra.mxu0 %v3176
    %3256 = vmatprep.subr.bf16.mxu0 0
    %3257 = vmatpush1.bf16.msra.mxu0 %v3177
    %3258 = vmatprep.mubr.bf16.mxu0 %v2960
    %3259 = vmatmul.mubr.bf16.gmra.mrb[0].mxu0 %v2959
    %v3260 = vpop.f32.mrb[0].mxu0
    %v3261 = vadd.f32 %v3032, %v3260
    %v3262 = vpop.f32.mrb[0].mxu0
    %v3263 = vpop.f32.mrb[0].mxu0
    %v3264 = vpop.f32.mrb[0].mxu0
    %3265 = vdwg.mxu0
    %3266 = vmatprep.subr.bf16.mxu0 0
    %3267 = vmatpush1.bf16.msra.mxu0 %v3178
    %3268 = vmatprep.subr.bf16.mxu0 0
    %3269 = vmatpush1.bf16.msra.mxu0 %v3179
    %3270 = vmatprep.subr.bf16.mxu0 0
    %3271 = vmatpush1.bf16.msra.mxu0 %v3180
    %3272 = vmatprep.subr.bf16.mxu0 0
    %3273 = vmatpush1.bf16.msra.mxu0 %v3181
    %3274 = vmatprep.subr.bf16.mxu0 0
    %3275 = vmatpush1.bf16.msra.mxu0 %v3182
    %3276 = vmatprep.subr.bf16.mxu0 0
    %3277 = vmatpush1.bf16.msra.mxu0 %v3183
    %3278 = vmatprep.subr.bf16.mxu0 0
    %3279 = vmatpush1.bf16.msra.mxu0 %v3184
    %3280 = vmatprep.subr.bf16.mxu0 0
    %3281 = vmatpush1.bf16.msra.mxu0 %v3185
    %3282 = vmatprep.subr.bf16.mxu0 0
    %3283 = vmatpush1.bf16.msra.mxu0 %v3186
    %3284 = vmatprep.subr.bf16.mxu0 0
    %3285 = vmatpush1.bf16.msra.mxu0 %v3187
    %3286 = vmatprep.subr.bf16.mxu0 0
    %3287 = vmatpush1.bf16.msra.mxu0 %v3188
    %3288 = vmatprep.subr.bf16.mxu0 0
    %3289 = vmatpush1.bf16.msra.mxu0 %v3189
    %3290 = vmatprep.subr.bf16.mxu0 0
    %3291 = vmatpush1.bf16.msra.mxu0 %v3190
    %3292 = vmatprep.subr.bf16.mxu0 0
    %3293 = vmatpush1.bf16.msra.mxu0 %v3191
    %3294 = vmatprep.subr.bf16.mxu0 0
    %3295 = vmatpush1.bf16.msra.mxu0 %v3192
    %3296 = vmatprep.subr.bf16.mxu0 0
    %3297 = vmatpush1.bf16.msra.mxu0 %v3193
    %3298 = vmatprep.mubr.bf16.mxu0 %v2962
    %3299 = vmatmul.mubr.bf16.gmra.mrb[0].mxu0 %v2961
    %v3300 = vpop.f32.mrb[0].mxu0
    %v3301 = vadd.f32 %v3261, %v3300
    %v3302 = vpop.f32.mrb[0].mxu0
    %v3303 = vpop.f32.mrb[0].mxu0
    %v3304 = vpop.f32.mrb[0].mxu0
    %3305 = vdwg.mxu0
    %v3306 = vpack.c.bf16 %v3301, %v3301
    %3307 = vst [vmem:[#allocation10] sm:$0xf] %v3306
    // Predicated region
    $region54: #{tpu_custom_call.1} parent=1 // pred_check
      _
    $region55: #{tpu_custom_call.1} parent=1 // pred_check_branch
      %3309 = sbr.rel (0) target = $region57
    $region56: #{tpu_custom_call.1} parent=1 // pred_region
      %s3311 = ssub.s32 64, 64
      %3312 = vsyncadd [#allocation4], %s3311
      %s3314 = sshll.u32 [#allocation10], 4
      %s3315 = int_to_ptr.vmem [resolvable:$true] %s3314
      %3317 = dma.vmem_to_hbm [thread:$0]  %s3315, 64, %s9, [#allocation4]
    $region57: #{tpu_custom_call.1} parent=1 // pred_fallthru
      _
    // Predicated region
    $region58: #{tpu_custom_call.1} parent=1 // pred_check
      _
    $region59: #{tpu_custom_call.1} parent=1 // pred_check_branch
      %3319 = sbr.rel (0) target = $region61
    $region60: #{tpu_custom_call.1} parent=1 // pred_region
      %3320 = dma.done [#allocation4], 64
    $region61: #{tpu_custom_call.1} parent=1 // pred_fallthru
      _
    %3321 = vsyncpa [#allocation3], 1
    %3322 = vsyncpa [#allocation6], 1
    %3323 = vsyncpa [#allocation9], 1
    %3324 = vsyncpa [#allocation4], 1

</llo_original>
